<compile_context>
chip_gen: v7x
topology: tpu7x:2x2x1
jax: 0.10.0
libtpu: 0.0.40
codegen_flags: <defaults>
</compile_context>

<pallas_src>
import functools

import jax
import jax.numpy as jnp
from jax.experimental import pallas as pl
from jax.experimental.pallas import tpu as pltpu


TILE_M = 256                 # M-tile; fits comfortably in scoped VMEM on v5e/v6e/v7x
NUM_CLASSES = 10
PADDED_N = 128               # fc2 logits padded to a lane-dense 128 columns
VMEM_LIMIT_BYTES = 32 * 1024 * 1024


def _compiler_params():
    return pltpu.CompilerParams(
        dimension_semantics=("parallel",),
        vmem_limit_bytes=VMEM_LIMIT_BYTES,
    )


def _tile_m(M):
    # Full-M block when small (full-dim blocks are always legal); 256 otherwise.
    return M if M <= TILE_M else TILE_M


# ----------------------------------------------------------------------------
# Pallas kernels
# ----------------------------------------------------------------------------
def _mm_bias_relu_kernel(x_ref, w_ref, b_ref, o_ref):
    """(tm,K)@(K,N) in bf16 -> f32 accumulate, + bias, ReLU."""
    acc = jnp.dot(x_ref[...], w_ref[...], preferred_element_type=jnp.float32)
    acc = acc + b_ref[...]                     # (1,N) broadcasts over rows, f32
    o_ref[...] = jnp.maximum(acc, 0.0).astype(o_ref.dtype)


def matmul_bias_relu(x, w_bf16, b_f32):
    """x:(M,K) any float, w:(K,N) bf16, b:(N,) f32 -> (M,N) f32. Tiled over M."""
    M, K = x.shape
    K2, N = w_bf16.shape
    assert K == K2
    tm = _tile_m(M)
    return pl.pallas_call(
        _mm_bias_relu_kernel,
        out_shape=jax.ShapeDtypeStruct((M, N), jnp.float32),
        grid=(pl.cdiv(M, tm),),
        in_specs=[
            pl.BlockSpec((tm, K), lambda i: (i, 0)),   # activations stream over M
            pl.BlockSpec((K, N), lambda i: (0, 0)),    # weights resident
            pl.BlockSpec((1, N), lambda i: (0, 0)),    # bias resident
        ],
        out_specs=pl.BlockSpec((tm, N), lambda i: (i, 0)),
        compiler_params=_compiler_params(),
    )(x.astype(jnp.bfloat16), w_bf16, b_f32.reshape(1, N).astype(jnp.float32))


def _fc_tail_kernel(x_ref, w1_ref, b1_ref, w2_ref, b2_ref, o_ref):
    """Fused fc1 + ReLU + fc2 + log_softmax. fc2 is padded to 128 lane-dense
    columns; padded columns carry bias = -1e30 so exp() underflows to 0 and the
    log_softmax normalizer only sees the 10 real logits."""
    h = jnp.dot(x_ref[...], w1_ref[...], preferred_element_type=jnp.float32)
    h = jnp.maximum(h + b1_ref[...], 0.0)
    logits = jnp.dot(h.astype(jnp.bfloat16), w2_ref[...],
                     preferred_element_type=jnp.float32)
    logits = logits + b2_ref[...]
    m = jnp.max(logits, axis=-1, keepdims=True)
    lse = m + jnp.log(jnp.sum(jnp.exp(logits - m), axis=-1, keepdims=True))
    o_ref[...] = (logits - lse).astype(o_ref.dtype)


def fc_tail(x, w1_bf16, b1_f32, w2_bf16, b2_f32):
    """x:(B,1600) -> (B,128) f32 log-probs (first 10 columns valid)."""
    M, K = x.shape
    K1, H = w1_bf16.shape
    H2, N = w2_bf16.shape
    assert K == K1 and H == H2
    tm = _tile_m(M)
    return pl.pallas_call(
        _fc_tail_kernel,
        out_shape=jax.ShapeDtypeStruct((M, N), jnp.float32),
        grid=(pl.cdiv(M, tm),),
        in_specs=[
            pl.BlockSpec((tm, K), lambda i: (i, 0)),
            pl.BlockSpec((K, H), lambda i: (0, 0)),
            pl.BlockSpec((1, H), lambda i: (0, 0)),
            pl.BlockSpec((H, N), lambda i: (0, 0)),
            pl.BlockSpec((1, N), lambda i: (0, 0)),
        ],
        out_specs=pl.BlockSpec((tm, N), lambda i: (i, 0)),
        compiler_params=_compiler_params(),
    )(x.astype(jnp.bfloat16), w1_bf16, b1_f32.reshape(1, H).astype(jnp.float32),
      w2_bf16, b2_f32.reshape(1, N).astype(jnp.float32))


# ----------------------------------------------------------------------------
# Glue (plain JAX): NHWC im2col and 2x2 floor-mode max-pool
# ----------------------------------------------------------------------------
def im2col_nhwc(x, kh, kw):
    """x:(B,H,W,C) -> ((B*Ho*Wo, kh*kw*C), Ho, Wo); columns ordered (di,dj,c)."""
    B, H, W, C = x.shape
    Ho, Wo = H - kh + 1, W - kw + 1
    patches = [x[:, di:di + Ho, dj:dj + Wo, :] for di in range(kh) for dj in range(kw)]
    p = jnp.concatenate(patches, axis=-1)          # (B,Ho,Wo,kh*kw*C)
    return p.reshape(B * Ho * Wo, kh * kw * C), Ho, Wo


def maxpool_2x2_nhwc(x):
    """2x2 max-pool, stride 2, floor mode (== nn.MaxPool2d(2,2)). x:(B,H,W,C)."""
    # Intentionally plain JAX (perf-review option (c)): avoids the narrow-lane
    # Pallas pool and its 4 strided HBM slices; XLA fuses this reduction.
    B, H, W, C = x.shape
    Ho, Wo = H // 2, W // 2
    x = x[:, :2 * Ho, :2 * Wo, :].reshape(B, Ho, 2, Wo, 2, C)
    return jnp.max(x, axis=(2, 4))


# ----------------------------------------------------------------------------
# Parameters (PyTorch layout + default-style uniform init), then prepared
# once into matmul-ready / TPU-friendly layouts.
# ----------------------------------------------------------------------------
def init_params(key):
    def uniform(key, shape, fan_in):
        bound = 1.0 / jnp.sqrt(float(fan_in))
        return jax.random.uniform(key, shape, jnp.float32, -bound, bound)

    keys = jax.random.split(key, 8)
    return {
        "w_conv1": uniform(keys[0], (32, 1, 3, 3), 1 * 3 * 3),
        "b_conv1": uniform(keys[1], (32,), 1 * 3 * 3),
        "w_conv2": uniform(keys[2], (64, 32, 3, 3), 32 * 3 * 3),
        "b_conv2": uniform(keys[3], (64,), 32 * 3 * 3),
        "w_fc1": uniform(keys[4], (128, 64 * 5 * 5), 64 * 5 * 5),
        "b_fc1": uniform(keys[5], (128,), 64 * 5 * 5),
        "w_fc2": uniform(keys[6], (10, 128), 128),
        "b_fc2": uniform(keys[7], (10,), 128),
    }


def prepare_params(params):
    """One-time (outside jit) layout prep: bf16 matmul weights, NHWC im2col
    column order, torch.flatten(C,H,W)->NHWC(H,W,C) permutation folded into
    fc1, and fc2 padded to 128 lane-dense columns."""
    p = {}
    # conv weights: (Cout,Cin,kh,kw) -> (kh*kw*Cin, Cout), rows ordered (di,dj,cin)
    p["w1"] = params["w_conv1"].transpose(2, 3, 1, 0).reshape(1 * 3 * 3, 32).astype(jnp.bfloat16)
    p["b1"] = params["b_conv1"].astype(jnp.float32)
    p["w2"] = params["w_conv2"].transpose(2, 3, 1, 0).reshape(32 * 3 * 3, 64).astype(jnp.bfloat16)
    p["b2"] = params["b_conv2"].astype(jnp.float32)
    # fc1: PyTorch columns ordered (c,h,w); permute to NHWC flatten order (h,w,c)
    wf1 = params["w_fc1"].reshape(128, 64, 5, 5).transpose(2, 3, 1, 0).reshape(64 * 5 * 5, 128)
    p["wf1"] = wf1.astype(jnp.bfloat16)
    p["bf1"] = params["b_fc1"].astype(jnp.float32)
    # fc2: (10,128) -> (128,10), zero-pad to (128,128); padded bias = -1e30
    wf2 = params["w_fc2"].T
    p["wf2"] = jnp.pad(wf2, ((0, 0), (0, PADDED_N - NUM_CLASSES))).astype(jnp.bfloat16)
    p["bf2"] = jnp.pad(params["b_fc2"].astype(jnp.float32),
                       (0, PADDED_N - NUM_CLASSES), constant_values=-1e30)
    return p


# ----------------------------------------------------------------------------
# Forward pass (matches MyAwesomeModel.forward, eval mode)
# ----------------------------------------------------------------------------
@jax.jit
def forward(x, prepped):
    B = x.shape[0]
    x = x.transpose(0, 2, 3, 1)                                   # NCHW -> NHWC once

    # conv1 (1->32, 3x3, valid) + ReLU + pool
    cols, Ho, Wo = im2col_nhwc(x, 3, 3)                           # (B*676, 9)
    y = matmul_bias_relu(cols, prepped["w1"], prepped["b1"])      # (B*676, 32)
    y = maxpool_2x2_nhwc(y.reshape(B, Ho, Wo, 32))                # (B,13,13,32)

    # conv2 (32->64, 3x3, valid) + ReLU + pool
    cols, Ho, Wo = im2col_nhwc(y, 3, 3)                           # (B*121, 288)
    y = matmul_bias_relu(cols, prepped["w2"], prepped["b2"])      # (B*121, 64)
    y = maxpool_2x2_nhwc(y.reshape(B, Ho, Wo, 64))                # (B,5,5,64)

    # flatten (NHWC order; torch.flatten ordering handled via wf1 permutation)
    y = y.reshape(B, 5 * 5 * 64)                                  # (B, 1600)

    # Dropout2d(0.25): identity in eval/inference mode.

    # fc1 + ReLU + fc2 + log_softmax fused in one lane-dense (128-col) kernel
    y = fc_tail(y, prepped["wf1"], prepped["bf1"], prepped["wf2"], prepped["bf2"])
    return y[:, :NUM_CLASSES]                                     # (B, 10)


if __name__ == "__main__":
    key = jax.random.PRNGKey(0)
    k_param, k_input = jax.random.split(key)
    params = init_params(k_param)
    prepped = prepare_params(params)

    # Input must be (B, 1, 28, 28) to match fc1's 64*5*5 flattened size.
    x = jax.random.normal(k_input, (2, 1, 28, 28), dtype=jnp.float32)

    out = jax.block_until_ready(forward(x, prepped))
    assert out.shape == (2, 10)
    # log_softmax rows should (approximately) exponentiate-sum to 1
    assert jnp.allclose(jnp.sum(jnp.exp(out), axis=1), 1.0, atol=1e-4)
    print("KERNEL_OK")
</pallas_src>

<mosaic_0001>
module attributes {stable_mosaic.version = 11 : i64} {
  func.func @_mm_bias_relu_kernel(%arg0: i32, %arg1: memref<256x9xbf16, #tpu.memory_space<vmem>>, %arg2: memref<9x32xbf16, #tpu.memory_space<vmem>>, %arg3: memref<1x32xf32, #tpu.memory_space<vmem>>, %arg4: memref<256x32xf32, #tpu.memory_space<vmem>>) attributes {dimension_semantics = [#tpu.dimension_semantics<parallel>], iteration_bounds = array<i64: 6>, scalar_prefetch = 0 : i64, scratch_operands = 0 : i64, tpu.core_type = #tpu.core_type<tc>, window_params = [{transform_indices = @transform_0, window_bounds = array<i64: 256, 9>}, {pipeline_mode = #tpu.pipeline_mode<synchronous>, transform_indices = @transform_1, window_bounds = array<i64: 9, 32>}, {pipeline_mode = #tpu.pipeline_mode<synchronous>, transform_indices = @transform_2, window_bounds = array<i64: 1, 32>}, {transform_indices = @transform_3, window_bounds = array<i64: 256, 32>}]} {
    %c0 = arith.constant 0 : index
    %c0_0 = arith.constant 0 : index
    %0 = vector.load %arg1[%c0, %c0_0] : memref<256x9xbf16, #tpu.memory_space<vmem>>, vector<256x9xbf16>
    %c0_1 = arith.constant 0 : index
    %c0_2 = arith.constant 0 : index
    %1 = vector.load %arg2[%c0_1, %c0_2] : memref<9x32xbf16, #tpu.memory_space<vmem>>, vector<9x32xbf16>
    %cst = arith.constant dense<0.000000e+00> : vector<256x32xf32>
    %2 = tpu.matmul %0, %1, %cst {dimension_numbers = #tpu.dot_dimension_numbers<[1], [0], [0], [1], [0, 0, 1, 1], [], []>} : vector<256x9xbf16>, vector<9x32xbf16>, vector<256x32xf32> -> vector<256x32xf32>
    %c0_3 = arith.constant 0 : index
    %c0_4 = arith.constant 0 : index
    %3 = vector.load %arg3[%c0_3, %c0_4] : memref<1x32xf32, #tpu.memory_space<vmem>>, vector<1x32xf32>
    %4 = vector.broadcast %3 : vector<1x32xf32> to vector<256x32xf32>
    %5 = arith.addf %2, %4 : vector<256x32xf32>
    %cst_5 = arith.constant 0.000000e+00 : f32
    %6 = vector.broadcast %cst_5 : f32 to vector<256x32xf32>
    %7 = arith.maximumf %5, %6 : vector<256x32xf32>
    %c0_6 = arith.constant 0 : index
    %c0_7 = arith.constant 0 : index
    %8 = vector.load %arg4[%c0_6, %c0_7] : memref<256x32xf32, #tpu.memory_space<vmem>>, vector<256x32xf32>
    tpu.vector_store %arg4[%c0_6, %c0_7], %7 {strides = array<i32>} : memref<256x32xf32, #tpu.memory_space<vmem>>, vector<256x32xf32>,
    return
  }
  func.func @transform_0(%arg0: i32) -> (i32, i32) {
    %c0_i32 = arith.constant 0 : i32
    %c0_i32_0 = arith.constant 0 : i32
    return %arg0, %c0_i32 : i32, i32
  }
  func.func @transform_1(%arg0: i32) -> (i32, i32) {
    %c0_i32 = arith.constant 0 : i32
    %c0_i32_0 = arith.constant 0 : i32
    %c0_i32_1 = arith.constant 0 : i32
    return %c0_i32, %c0_i32_0 : i32, i32
  }
  func.func @transform_2(%arg0: i32) -> (i32, i32) {
    %c0_i32 = arith.constant 0 : i32
    %c0_i32_0 = arith.constant 0 : i32
    %c0_i32_1 = arith.constant 0 : i32
    return %c0_i32, %c0_i32_0 : i32, i32
  }
  func.func @transform_3(%arg0: i32) -> (i32, i32) {
    %c0_i32 = arith.constant 0 : i32
    %c0_i32_0 = arith.constant 0 : i32
    return %arg0, %c0_i32 : i32, i32
  }
}

module attributes {stable_mosaic.version = 11 : i64} {
  func.func @_mm_bias_relu_kernel(%arg0: i32, %arg1: memref<242x288xbf16, #tpu.memory_space<vmem>>, %arg2: memref<288x64xbf16, #tpu.memory_space<vmem>>, %arg3: memref<1x64xf32, #tpu.memory_space<vmem>>, %arg4: memref<242x64xf32, #tpu.memory_space<vmem>>) attributes {dimension_semantics = [#tpu.dimension_semantics<parallel>], iteration_bounds = array<i64: 1>, scalar_prefetch = 0 : i64, scratch_operands = 0 : i64, tpu.core_type = #tpu.core_type<tc>, window_params = [{transform_indices = @transform_0, window_bounds = array<i64: 242, 288>}, {pipeline_mode = #tpu.pipeline_mode<synchronous>, transform_indices = @transform_1, window_bounds = array<i64: 288, 64>}, {pipeline_mode = #tpu.pipeline_mode<synchronous>, transform_indices = @transform_2, window_bounds = array<i64: 1, 64>}, {transform_indices = @transform_3, window_bounds = array<i64: 242, 64>}]} {
    %c0 = arith.constant 0 : index
    %c0_0 = arith.constant 0 : index
    %0 = vector.load %arg1[%c0, %c0_0] : memref<242x288xbf16, #tpu.memory_space<vmem>>, vector<242x288xbf16>
    %c0_1 = arith.constant 0 : index
    %c0_2 = arith.constant 0 : index
    %1 = vector.load %arg2[%c0_1, %c0_2] : memref<288x64xbf16, #tpu.memory_space<vmem>>, vector<288x64xbf16>
    %cst = arith.constant dense<0.000000e+00> : vector<242x64xf32>
    %2 = tpu.matmul %0, %1, %cst {dimension_numbers = #tpu.dot_dimension_numbers<[1], [0], [0], [1], [0, 0, 1, 1], [], []>} : vector<242x288xbf16>, vector<288x64xbf16>, vector<242x64xf32> -> vector<242x64xf32>
    %c0_3 = arith.constant 0 : index
    %c0_4 = arith.constant 0 : index
    %3 = vector.load %arg3[%c0_3, %c0_4] : memref<1x64xf32, #tpu.memory_space<vmem>>, vector<1x64xf32>
    %4 = vector.broadcast %3 : vector<1x64xf32> to vector<242x64xf32>
    %5 = arith.addf %2, %4 : vector<242x64xf32>
    %cst_5 = arith.constant 0.000000e+00 : f32
    %6 = vector.broadcast %cst_5 : f32 to vector<242x64xf32>
    %7 = arith.maximumf %5, %6 : vector<242x64xf32>
    %c0_6 = arith.constant 0 : index
    %c0_7 = arith.constant 0 : index
    %8 = vector.load %arg4[%c0_6, %c0_7] : memref<242x64xf32, #tpu.memory_space<vmem>>, vector<242x64xf32>
    tpu.vector_store %arg4[%c0_6, %c0_7], %7 {strides = array<i32>} : memref<242x64xf32, #tpu.memory_space<vmem>>, vector<242x64xf32>,
    return
  }
  func.func @transform_0(%arg0: i32) -> (i32, i32) {
    %c0_i32 = arith.constant 0 : i32
    %c0_i32_0 = arith.constant 0 : i32
    return %arg0, %c0_i32 : i32, i32
  }
  func.func @transform_1(%arg0: i32) -> (i32, i32) {
    %c0_i32 = arith.constant 0 : i32
    %c0_i32_0 = arith.constant 0 : i32
    %c0_i32_1 = arith.constant 0 : i32
    return %c0_i32, %c0_i32_0 : i32, i32
  }
  func.func @transform_2(%arg0: i32) -> (i32, i32) {
    %c0_i32 = arith.constant 0 : i32
    %c0_i32_0 = arith.constant 0 : i32
    %c0_i32_1 = arith.constant 0 : i32
    return %c0_i32, %c0_i32_0 : i32, i32
  }
  func.func @transform_3(%arg0: i32) -> (i32, i32) {
    %c0_i32 = arith.constant 0 : i32
    %c0_i32_0 = arith.constant 0 : i32
    return %arg0, %c0_i32 : i32, i32
  }
}

module attributes {stable_mosaic.version = 11 : i64} {
  func.func @_fc_tail_kernel(%arg0: i32, %arg1: memref<2x1600xbf16, #tpu.memory_space<vmem>>, %arg2: memref<1600x128xbf16, #tpu.memory_space<vmem>>, %arg3: memref<1x128xf32, #tpu.memory_space<vmem>>, %arg4: memref<128x128xbf16, #tpu.memory_space<vmem>>, %arg5: memref<1x128xf32, #tpu.memory_space<vmem>>, %arg6: memref<2x128xf32, #tpu.memory_space<vmem>>) attributes {dimension_semantics = [#tpu.dimension_semantics<parallel>], iteration_bounds = array<i64: 1>, scalar_prefetch = 0 : i64, scratch_operands = 0 : i64, tpu.core_type = #tpu.core_type<tc>, window_params = [{transform_indices = @transform_0, window_bounds = array<i64: 2, 1600>}, {pipeline_mode = #tpu.pipeline_mode<synchronous>, transform_indices = @transform_1, window_bounds = array<i64: 1600, 128>}, {pipeline_mode = #tpu.pipeline_mode<synchronous>, transform_indices = @transform_2, window_bounds = array<i64: 1, 128>}, {pipeline_mode = #tpu.pipeline_mode<synchronous>, transform_indices = @transform_3, window_bounds = array<i64: 128, 128>}, {pipeline_mode = #tpu.pipeline_mode<synchronous>, transform_indices = @transform_4, window_bounds = array<i64: 1, 128>}, {transform_indices = @transform_5, window_bounds = array<i64: 2, 128>}]} {
    %c0 = arith.constant 0 : index
    %c0_0 = arith.constant 0 : index
    %0 = vector.load %arg1[%c0, %c0_0] : memref<2x1600xbf16, #tpu.memory_space<vmem>>, vector<2x1600xbf16>
    %c0_1 = arith.constant 0 : index
    %c0_2 = arith.constant 0 : index
    %1 = vector.load %arg2[%c0_1, %c0_2] : memref<1600x128xbf16, #tpu.memory_space<vmem>>, vector<1600x128xbf16>
    %cst = arith.constant dense<0.000000e+00> : vector<2x128xf32>
    %2 = tpu.matmul %0, %1, %cst {dimension_numbers = #tpu.dot_dimension_numbers<[1], [0], [0], [1], [0, 0, 1, 1], [], []>} : vector<2x1600xbf16>, vector<1600x128xbf16>, vector<2x128xf32> -> vector<2x128xf32>
    %c0_3 = arith.constant 0 : index
    %c0_4 = arith.constant 0 : index
    %3 = vector.load %arg3[%c0_3, %c0_4] : memref<1x128xf32, #tpu.memory_space<vmem>>, vector<1x128xf32>
    %4 = vector.broadcast %3 : vector<1x128xf32> to vector<2x128xf32>
    %5 = arith.addf %2, %4 : vector<2x128xf32>
    %cst_5 = arith.constant 0.000000e+00 : f32
    %6 = vector.broadcast %cst_5 : f32 to vector<2x128xf32>
    %7 = arith.maximumf %5, %6 : vector<2x128xf32>
    %8 = arith.truncf %7 : vector<2x128xf32> to vector<2x128xbf16>
    %c0_6 = arith.constant 0 : index
    %c0_7 = arith.constant 0 : index
    %9 = vector.load %arg4[%c0_6, %c0_7] : memref<128x128xbf16, #tpu.memory_space<vmem>>, vector<128x128xbf16>
    %cst_8 = arith.constant dense<0.000000e+00> : vector<2x128xf32>
    %10 = tpu.matmul %8, %9, %cst_8 {dimension_numbers = #tpu.dot_dimension_numbers<[1], [0], [0], [1], [0, 0, 1, 1], [], []>} : vector<2x128xbf16>, vector<128x128xbf16>, vector<2x128xf32> -> vector<2x128xf32>
    %c0_9 = arith.constant 0 : index
    %c0_10 = arith.constant 0 : index
    %11 = vector.load %arg5[%c0_9, %c0_10] : memref<1x128xf32, #tpu.memory_space<vmem>>, vector<1x128xf32>
    %12 = vector.broadcast %11 : vector<1x128xf32> to vector<2x128xf32>
    %13 = arith.addf %10, %12 : vector<2x128xf32>
    %cst_11 = arith.constant dense<0xFF800000> : vector<2xf32>
    %14 = vector.multi_reduction <maximumf>, %13, %cst_11 [1] : vector<2x128xf32> to vector<2xf32>
    %15 = vector.shape_cast %14 : vector<2xf32> to vector<2x1xf32>
    %16 = vector.broadcast %15 : vector<2x1xf32> to vector<2x128xf32>
    %17 = arith.subf %13, %16 : vector<2x128xf32>
    %18 = math.exp %17 : vector<2x128xf32>
    %cst_12 = arith.constant dense<0.000000e+00> : vector<2xf32>
    %19 = vector.multi_reduction <add>, %18, %cst_12 [1] : vector<2x128xf32> to vector<2xf32>
    %20 = vector.shape_cast %19 : vector<2xf32> to vector<2x1xf32>
    %21 = math.log %20 : vector<2x1xf32>
    %22 = arith.addf %15, %21 : vector<2x1xf32>
    %23 = vector.broadcast %22 : vector<2x1xf32> to vector<2x128xf32>
    %24 = arith.subf %13, %23 : vector<2x128xf32>
    %c0_13 = arith.constant 0 : index
    %c0_14 = arith.constant 0 : index
    %25 = vector.load %arg6[%c0_13, %c0_14] : memref<2x128xf32, #tpu.memory_space<vmem>>, vector<2x128xf32>
    tpu.vector_store %arg6[%c0_13, %c0_14], %24 {strides = array<i32>} : memref<2x128xf32, #tpu.memory_space<vmem>>, vector<2x128xf32>,
    return
  }
  func.func @transform_0(%arg0: i32) -> (i32, i32) {
    %c0_i32 = arith.constant 0 : i32
    %c0_i32_0 = arith.constant 0 : i32
    return %arg0, %c0_i32 : i32, i32
  }
  func.func @transform_1(%arg0: i32) -> (i32, i32) {
    %c0_i32 = arith.constant 0 : i32
    %c0_i32_0 = arith.constant 0 : i32
    %c0_i32_1 = arith.constant 0 : i32
    return %c0_i32, %c0_i32_0 : i32, i32
  }
  func.func @transform_2(%arg0: i32) -> (i32, i32) {
    %c0_i32 = arith.constant 0 : i32
    %c0_i32_0 = arith.constant 0 : i32
    %c0_i32_1 = arith.constant 0 : i32
    return %c0_i32, %c0_i32_0 : i32, i32
  }
  func.func @transform_3(%arg0: i32) -> (i32, i32) {
    %c0_i32 = arith.constant 0 : i32
    %c0_i32_0 = arith.constant 0 : i32
    %c0_i32_1 = arith.constant 0 : i32
    return %c0_i32, %c0_i32_0 : i32, i32
  }
  func.func @transform_4(%arg0: i32) -> (i32, i32) {
    %c0_i32 = arith.constant 0 : i32
    %c0_i32_0 = arith.constant 0 : i32
    %c0_i32_1 = arith.constant 0 : i32
    return %c0_i32, %c0_i32_0 : i32, i32
  }
  func.func @transform_5(%arg0: i32) -> (i32, i32) {
    %c0_i32 = arith.constant 0 : i32
    %c0_i32_0 = arith.constant 0 : i32
    return %arg0, %c0_i32 : i32, i32
  }
}

</mosaic_0001>

<llo_original>
// kernel: forward.3
$region0: #{forward.3}
  #allocation0 [shape = 'u32[]', space=smem, size = 0x4, offset = 0x4, fixed_abs, tag = 'smem constant byte address 0x4 - core index']
  #allocation1 [shape = 'u32[144,128]{1,0:T(1,128)}', space=vmem, size = 0x12000, scoped, tag = 'internal scratch']
  %s0 = inlined_call_operand.vmem [shape: bf16[1352,9], index: 0, kind: input, shape index: {}]
  %s1 = inlined_call_operand.vmem [shape: bf16[9,32], index: 1, kind: input, shape index: {}]
  %s2 = inlined_call_operand.vmem [shape: f32[1,32], index: 2, kind: input, shape index: {}]
  %s3 = inlined_call_operand.vmem [shape: f32[1352,32], index: 3, kind: output, shape index: {}]
  %s4 = sld [smem:[#allocation0]]
  $region93: #{forward.3} parent=0
    _
  %s6 = ssub.s32 1, %s4
  %s7 = scalar_select 0, %s6, %s4
  $region1: #{forward.3} parent=0
    #allocation2 [shape = 'u8[262144]{0}', space=vmem, size = 0x40000, scoped, tag = 'output window, operand 0']
    loop: start=0, step=1, limit=8
    $region2: #{forward.3} parent=1 // loop_pre_header
      _
    $region3: #{forward.3} parent=1 // loop_header
      %s9 = sphi 0, %s13
      %p10 = scmp.ge.s32.totalorder %s9, 8
      %s19 = sphi 0, %s21
      %s22 = sphi 0, %s19
      %s23 = sphi 0, %s22
      %s39 = sphi 0, %s23
      %s43 = sphi 0, %s43
      %s45 = sphi 0, %s43
      %s46 = sphi 0, %s45
      %s60 = sphi 0, %s46
      %s64 = sphi 0, %s64
      %s66 = sphi 0, %s64
      %s67 = sphi 0, %s66
      %s81 = sphi 0, %s67
      %s87 = sphi 0, %s89
      %s90 = sphi 0, %s87
      %s91 = sphi 0, %s90
      %s107 = sphi 0, %s91
    $region4: #{forward.3} parent=1 // loop_header_branch
      %12 = sbr.rel (%p10) target = $region8
    $region5: #{forward.3} parent=1 // loop_body
      %s14 = ssub.s32 %s9, 1
      %s15 = ssub.s32 %s9, 2
      %s16 = sadd.s32 %s9, 1
      %s17 = ssub.s32 %s9, %s16
      %p18 = scmp.eq.s32.totalorder %s17, 0
      %s20 = sadd.s32 %s19, 1
      %s21 = scalar_select %p18, %s19, %s20
      %p24 = pneg %p18
      %p25 = scmp.eq.s32.totalorder %s9, 5
      %p26 = por %p24, %p25
      %p27 = scmp.ne.s32.totalorder %s19, %s22
      %p28 = scmp.eq.s32.totalorder %s9, 0
      %p29 = por %p27, %p28
      %p30 = scmp.ne.s32.totalorder %s19, %s22
      %p31 = scmp.eq.s32.totalorder %s14, 5
      %p32 = por %p30, %p31
      %p33 = scmp.ne.s32.totalorder %s22, %s23
      %p34 = scmp.eq.s32.totalorder %s14, 0
      %p35 = por %p33, %p34
      %p36 = scmp.ne.s32.totalorder %s22, %s23
      %p37 = scmp.eq.s32.totalorder %s15, 5
      %p38 = por %p36, %p37
      %p40 = scmp.ne.s32.totalorder %s23, %s39
      %p41 = scmp.eq.s32.totalorder %s15, 0
      %p42 = por %p40, %p41
      %s44 = sadd.s32 %s43, 1
      %p47 = scmp.eq.s32.totalorder %s9, 5
      %p48 = scmp.ne.s32.totalorder %s43, %s45
      %p49 = scmp.eq.s32.totalorder %s9, 0
      %p50 = por %p48, %p49
      %p51 = scmp.ne.s32.totalorder %s43, %s45
      %p52 = scmp.eq.s32.totalorder %s14, 5
      %p53 = por %p51, %p52
      %p54 = scmp.ne.s32.totalorder %s45, %s46
      %p55 = scmp.eq.s32.totalorder %s14, 0
      %p56 = por %p54, %p55
      %p57 = scmp.ne.s32.totalorder %s45, %s46
      %p58 = scmp.eq.s32.totalorder %s15, 5
      %p59 = por %p57, %p58
      %p61 = scmp.ne.s32.totalorder %s46, %s60
      %p62 = scmp.eq.s32.totalorder %s15, 0
      %p63 = por %p61, %p62
      %s65 = sadd.s32 %s64, 1
      %p68 = scmp.eq.s32.totalorder %s9, 5
      %p69 = scmp.ne.s32.totalorder %s64, %s66
      %p70 = scmp.eq.s32.totalorder %s9, 0
      %p71 = por %p69, %p70
      %p72 = scmp.ne.s32.totalorder %s64, %s66
      %p73 = scmp.eq.s32.totalorder %s14, 5
      %p74 = por %p72, %p73
      %p75 = scmp.ne.s32.totalorder %s66, %s67
      %p76 = scmp.eq.s32.totalorder %s14, 0
      %p77 = por %p75, %p76
      %p78 = scmp.ne.s32.totalorder %s66, %s67
      %p79 = scmp.eq.s32.totalorder %s15, 5
      %p80 = por %p78, %p79
      %p82 = scmp.ne.s32.totalorder %s67, %s81
      %p83 = scmp.eq.s32.totalorder %s15, 0
      %p84 = por %p82, %p83
      %s85 = ssub.s32 %s9, %s16
      %p86 = scmp.eq.s32.totalorder %s85, 0
      %s88 = sadd.s32 %s87, 1
      %s89 = scalar_select %p86, %s87, %s88
      %p92 = pneg %p86
      %p93 = scmp.eq.s32.totalorder %s9, 5
      %p94 = por %p92, %p93
      %p95 = scmp.ne.s32.totalorder %s87, %s90
      %p96 = scmp.eq.s32.totalorder %s9, 0
      %p97 = por %p95, %p96
      %p98 = scmp.ne.s32.totalorder %s87, %s90
      %p99 = scmp.eq.s32.totalorder %s14, 5
      %p100 = por %p98, %p99
      %p101 = scmp.ne.s32.totalorder %s90, %s91
      %p102 = scmp.eq.s32.totalorder %s14, 0
      %p103 = por %p101, %p102
      %p104 = scmp.ne.s32.totalorder %s90, %s91
      %p105 = scmp.eq.s32.totalorder %s15, 5
      %p106 = por %p104, %p105
      %p108 = scmp.ne.s32.totalorder %s91, %s107
      %p109 = scmp.eq.s32.totalorder %s15, 0
      %p110 = por %p108, %p109
      %p111 = scmp.le.s32.totalorder 1, %s9
      %p112 = scmp.lt.s32.totalorder %s9, 7
      %p113 = pnand %p111, %p112
      %p114 = pneg %p113
      // Predicated region
      $region9: #{forward.3} parent=5 // pred_check
        _
      $region10: #{forward.3} parent=5 // pred_check_branch
        %116 = sbr.rel (%p113) target = $region12
      $region11: #{forward.3} parent=5 // pred_region
        %s117 = ssub.s32 %s9, 1
        // Predicated region
        $region13: #{forward.3} parent=11 // pred_check
          %p118 = pneg %p56
        $region14: #{forward.3} parent=11 // pred_check_branch
          %120 = sbr.rel (%p118) target = $region16
        $region15: #{forward.3} parent=11 // pred_region
          _
        $region16: #{forward.3} parent=11 // pred_fallthru
          _
        // Predicated region
        $region17: #{forward.3} parent=11 // pred_check
          %p121 = pneg %p77
        $region18: #{forward.3} parent=11 // pred_check_branch
          %123 = sbr.rel (%p121) target = $region20
        $region19: #{forward.3} parent=11 // pred_region
          _
        $region20: #{forward.3} parent=11 // pred_fallthru
          _
      $region12: #{forward.3} parent=5 // pred_fallthru
        _
      %p124 = scmp.lt.s32.totalorder %s9, 6
      // Predicated region
      $region21: #{forward.3} parent=5 // pred_check
        %p125 = pneg %p124
      $region22: #{forward.3} parent=5 // pred_check_branch
        %127 = sbr.rel (%p125) target = $region24
      $region23: #{forward.3} parent=5 // pred_region
        // Predicated region
        $region25: #{forward.3} parent=23 // pred_check
          %p128 = pneg %p29
        $region26: #{forward.3} parent=23 // pred_check_branch
          %130 = sbr.rel (%p128) target = $region28
        $region27: #{forward.3} parent=23 // pred_region
          %s131 = smul.u32 32, %s9
          %s132 = ssub.s32 169, %s131
          %p133 = scmp.lt.s32.totalorder %s132, 32
          %s134 = scalar_select %p133, %s132, 32
          %s135 = smul.u32 64, %s134
          %p136 = scmp.lt.s32.totalorder %s131, 168
          %s137 = scalar_select %p136, %s131, 168
          %s138 = smul.addr %s137, 4
          %s139 = scalar_lea.vmem %s0, %s138
          %s140 = smul.u32 32, %s9
          %s141 = ssub.s32 169, %s140
          %p142 = scmp.lt.s32.totalorder %s141, 32
          %s143 = scalar_select %p142, %s141, 32
          %s144 = smul.u32 64, %s143
        $region28: #{forward.3} parent=23 // pred_fallthru
          _
      $region24: #{forward.3} parent=5 // pred_fallthru
        _
      %p145 = scmp.le.s32.totalorder 1, %s9
      %p146 = scmp.lt.s32.totalorder %s9, 7
      %p147 = pnand %p145, %p146
      %p148 = pneg %p147
      // Predicated region
      $region29: #{forward.3} parent=5 // pred_check
        _
      $region30: #{forward.3} parent=5 // pred_check_branch
        %150 = sbr.rel (%p147) target = $region32
      $region31: #{forward.3} parent=5 // pred_region
        %s151 = ssub.s32 %s9, 1
        %s152 = smul.u32 32, %s14
        %s153 = ssub.s32 169, %s152
        %p154 = scmp.lt.s32.totalorder %s153, 32
        %s155 = scalar_select %p154, %s153, 32
        %s156 = smul.u32 64, %s155
        %p157 = scmp.lt.s32.totalorder %s152, 168
        %s158 = scalar_select %p157, %s152, 168
        %s159 = smul.addr %s158, 4
        %s160 = scalar_lea.vmem %s0, %s159
        %p161 = pneg %p35
        %p162 = pneg %p32
        %p163 = pneg %p56
        %p164 = pneg %p53
        %p165 = pneg %p77
        %p166 = pneg %p74
        %p167 = pneg %p103
        %p168 = pneg %p100
        %s169 = sand.u32 %s90, 1
        %s170 = sand.u32 %s90, 1
        %s171 = smul.addr %s170, 256
        %s172 = scalar_lea.vmem [#allocation2], %s171
        %s173 = smul.u32 32, %s14
        %s174 = ssub.s32 169, %s173
        %p175 = scmp.lt.s32.totalorder %s174, 32
        %s176 = scalar_select %p175, %s174, 32
        %s177 = smul.u32 64, %s176
        %p178 = scmp.lt.s32.totalorder %s173, 168
        %s179 = scalar_select %p178, %s173, 168
        %s180 = smul.addr %s179, 4
        %s181 = scalar_lea.vmem %s0, %s180
        %s182 = smul.u32 32, %s14
        %s183 = ssub.s32 169, %s182
        %p184 = scmp.lt.s32.totalorder %s183, 32
        %s185 = scalar_select %p184, %s183, 32
        %s186 = smul.u32 64, %s185
        %s187 = smul.u32 32, %s14
        %s188 = ssub.s32 169, %s187
        %p189 = scmp.lt.s32.totalorder %s188, 32
        %s190 = scalar_select %p189, %s188, 32
        %s191 = smul.u32 128, %s190
        %v193 = vld [vmem:[%s181] sm:$0xf]
        %v194 = vld [vmem:[%s181 + $0x4] sm:$0xf]
        %v195 = vld [vmem:[%s181 + $0x8] sm:$0xf]
        %v196 = vld [vmem:[%s181 + $0xc] sm:$0xf]
        %v197 = vld [vmem:[%s181 + $0x10] sm:$0xf]
        %v198 = vld [vmem:[%s181 + $0x14] sm:$0xf]
        %v199 = vld [vmem:[%s181 + $0x18] sm:$0xf]
        %v200 = vld [vmem:[%s181 + $0x1c] sm:$0xf]
        %v201 = vld [vmem:[%s181 + $0x20] sm:$0xf]
        %v202 = vld [vmem:[%s181 + $0x24] sm:$0xf]
        %v203 = vld [vmem:[%s181 + $0x28] sm:$0xf]
        %v204 = vld [vmem:[%s181 + $0x2c] sm:$0xf]
        %v205 = vld [vmem:[%s181 + $0x30] sm:$0xf]
        %v206 = vld [vmem:[%s181 + $0x34] sm:$0xf]
        %v207 = vld [vmem:[%s181 + $0x38] sm:$0xf]
        %v208 = vld [vmem:[%s181 + $0x3c] sm:$0xf]
        %v209 = vld [vmem:[%s181 + $0x40] sm:$0xf]
        %v210 = vld [vmem:[%s181 + $0x44] sm:$0xf]
        %v211 = vld [vmem:[%s181 + $0x48] sm:$0xf]
        %v212 = vld [vmem:[%s181 + $0x4c] sm:$0xf]
        %v213 = vld [vmem:[%s181 + $0x50] sm:$0xf]
        %v214 = vld [vmem:[%s181 + $0x54] sm:$0xf]
        %v215 = vld [vmem:[%s181 + $0x58] sm:$0xf]
        %v216 = vld [vmem:[%s181 + $0x5c] sm:$0xf]
        %v217 = vld [vmem:[%s181 + $0x60] sm:$0xf]
        %v218 = vld [vmem:[%s181 + $0x64] sm:$0xf]
        %v219 = vld [vmem:[%s181 + $0x68] sm:$0xf]
        %v220 = vld [vmem:[%s181 + $0x6c] sm:$0xf]
        %v221 = vld [vmem:[%s181 + $0x70] sm:$0xf]
        %v222 = vld [vmem:[%s181 + $0x74] sm:$0xf]
        %v223 = vld [vmem:[%s181 + $0x78] sm:$0xf]
        %v224 = vld [vmem:[%s181 + $0x7c] sm:$0xf]
        %v225 = vld [vmem:[%s1] sm:$0xf]
        %v226 = vld [vmem:[%s1 + $0x4] sm:$0x1]
        %v227 = vld [vmem:[%s2] sm:$0x1]
        %v229 = vlaneseq
        %v230 = vshrl.u32 %v229, 7
        %v231 = vsub.s32 0, %v230
        %v232 = vrot.slane %v227, %v231
        %v266 = vunpack.c.l.b16 %v193
        %v267 = vunpack.c.l.b16 %v194
        %v268 = vunpack.c.l.b16 %v195
        %v269 = vunpack.c.l.b16 %v196
        %v270 = vunpack.c.l.b16 %v197
        %v271 = vunpack.c.l.b16 %v198
        %v272 = vunpack.c.l.b16 %v199
        %v273 = vunpack.c.l.b16 %v200
        %v274 = vunpack.c.l.b16 %v201
        %v275 = vunpack.c.l.b16 %v202
        %v276 = vunpack.c.l.b16 %v203
        %v277 = vunpack.c.l.b16 %v204
        %v278 = vunpack.c.l.b16 %v205
        %v279 = vunpack.c.l.b16 %v206
        %v280 = vunpack.c.l.b16 %v207
        %v281 = vunpack.c.l.b16 %v208
        %v282 = vunpack.c.l.b16 %v209
        %v283 = vunpack.c.l.b16 %v210
        %v284 = vunpack.c.l.b16 %v211
        %v285 = vunpack.c.l.b16 %v212
        %v286 = vunpack.c.l.b16 %v213
        %v287 = vunpack.c.l.b16 %v214
        %v288 = vunpack.c.l.b16 %v215
        %v289 = vunpack.c.l.b16 %v216
        %v290 = vunpack.c.l.b16 %v217
        %v291 = vunpack.c.l.b16 %v218
        %v292 = vunpack.c.l.b16 %v219
        %v293 = vunpack.c.l.b16 %v220
        %v294 = vunpack.c.l.b16 %v221
        %v295 = vunpack.c.l.b16 %v222
        %v296 = vunpack.c.l.b16 %v223
        %v297 = vunpack.c.l.b16 %v224
        %v298 = vpack.c.b16 %v267, %v266
        %v299 = vpack.c.b16 %v269, %v268
        %v300 = vpack.c.b16 %v271, %v270
        %v301 = vpack.c.b16 %v273, %v272
        %v302 = vpack.c.b16 %v275, %v274
        %v303 = vpack.c.b16 %v277, %v276
        %v304 = vpack.c.b16 %v279, %v278
        %v305 = vpack.c.b16 %v281, %v280
        %v306 = vpack.c.b16 %v283, %v282
        %v307 = vpack.c.b16 %v285, %v284
        %v308 = vpack.c.b16 %v287, %v286
        %v309 = vpack.c.b16 %v289, %v288
        %v310 = vpack.c.b16 %v291, %v290
        %v311 = vpack.c.b16 %v293, %v292
        %v312 = vpack.c.b16 %v295, %v294
        %v313 = vpack.c.b16 %v297, %v296
        %v316 = vunpack.c.l.b16 %v225
        %v317 = vunpack.c.l.b16 %v226
        %v318 = vpack.c.b16 %v317, %v316
        %vm319 = vcmask 72704
        %v321 = vsel %vm319, %v298, 0
        %v324 = vsel %vm319, %v299, 0
        %v327 = vsel %vm319, %v300, 0
        %v330 = vsel %vm319, %v301, 0
        %v333 = vsel %vm319, %v302, 0
        %v336 = vsel %vm319, %v303, 0
        %v339 = vsel %vm319, %v304, 0
        %v342 = vsel %vm319, %v305, 0
        %v345 = vsel %vm319, %v306, 0
        %v348 = vsel %vm319, %v307, 0
        %v351 = vsel %vm319, %v308, 0
        %v354 = vsel %vm319, %v309, 0
        %v357 = vsel %vm319, %v310, 0
        %v360 = vsel %vm319, %v311, 0
        %v363 = vsel %vm319, %v312, 0
        %v366 = vsel %vm319, %v313, 0
        %vm368 = vcmask 1043456
        %vm369 = vcmask 1044480
        %v370 = vsel %vm368, 4294967295, 65535
        %v371 = vsel %vm369, %v370, 0
        %v373 = vand.u32 %v318, %v371
        %375 = vmatprep.subr.bf16.mxu0 0
        %376 = vmatpush1.bf16.msra.mxu0 %v373
        %377 = vmatprep.subr.bf16.mxu0 0
        %378 = vmatpush1.bf16.msra.mxu0 0
        %379 = vmatprep.subr.bf16.mxu0 0
        %380 = vmatpush1.bf16.msra.mxu0 0
        %381 = vmatprep.subr.bf16.mxu0 0
        %382 = vmatpush1.bf16.msra.mxu0 0
        %383 = vmatprep.subr.bf16.mxu0 0
        %384 = vmatpush1.bf16.msra.mxu0 0
        %385 = vmatprep.subr.bf16.mxu0 0
        %386 = vmatpush1.bf16.msra.mxu0 0
        %387 = vmatprep.subr.bf16.mxu0 0
        %388 = vmatpush1.bf16.msra.mxu0 0
        %389 = vmatprep.subr.bf16.mxu0 0
        %390 = vmatpush1.bf16.msra.mxu0 0
        %391 = vmatprep.subr.bf16.mxu0 0
        %392 = vmatpush1.bf16.msra.mxu0 0
        %393 = vmatprep.subr.bf16.mxu0 0
        %394 = vmatpush1.bf16.msra.mxu0 0
        %395 = vmatprep.subr.bf16.mxu0 0
        %396 = vmatpush1.bf16.msra.mxu0 0
        %397 = vmatprep.subr.bf16.mxu0 0
        %398 = vmatpush1.bf16.msra.mxu0 0
        %399 = vmatprep.subr.bf16.mxu0 0
        %400 = vmatpush1.bf16.msra.mxu0 0
        %401 = vmatprep.subr.bf16.mxu0 0
        %402 = vmatpush1.bf16.msra.mxu0 0
        %403 = vmatprep.subr.bf16.mxu0 0
        %404 = vmatpush1.bf16.msra.mxu0 0
        %405 = vmatprep.subr.bf16.mxu0 0
        %406 = vmatpush1.bf16.msra.mxu0 0
        %407 = vmatprep.mubr.bf16.mxu0 0
        %408 = vmatmul.mubr.bf16.gmra.mrb[0].mxu0 %v321
        %v409 = vpop.f32.mrb[0].mxu0
        %v410 = vadd.f32 %v232, %v409
        %v411 = vpop.f32.mrb[0].mxu0
        %v412 = vpop.f32.mrb[0].mxu0
        %v413 = vadd.f32 %v232, %v412
        %v414 = vpop.f32.mrb[0].mxu0
        %415 = vmatprep.mubr.bf16.mxu0 0
        %416 = vmatmul.mubr.bf16.gmra.mrb[0].mxu0 %v324
        %v417 = vpop.f32.mrb[0].mxu0
        %v418 = vadd.f32 %v232, %v417
        %v419 = vpop.f32.mrb[0].mxu0
        %v420 = vpop.f32.mrb[0].mxu0
        %v421 = vadd.f32 %v232, %v420
        %v422 = vpop.f32.mrb[0].mxu0
        %423 = vmatprep.mubr.bf16.mxu0 0
        %424 = vmatmul.mubr.bf16.gmra.mrb[0].mxu0 %v327
        %v425 = vpop.f32.mrb[0].mxu0
        %v426 = vadd.f32 %v232, %v425
        %v427 = vpop.f32.mrb[0].mxu0
        %v428 = vpop.f32.mrb[0].mxu0
        %v429 = vadd.f32 %v232, %v428
        %v430 = vpop.f32.mrb[0].mxu0
        %431 = vmatprep.mubr.bf16.mxu0 0
        %432 = vmatmul.mubr.bf16.gmra.mrb[0].mxu0 %v330
        %v433 = vpop.f32.mrb[0].mxu0
        %v434 = vadd.f32 %v232, %v433
        %v435 = vpop.f32.mrb[0].mxu0
        %v436 = vpop.f32.mrb[0].mxu0
        %v437 = vadd.f32 %v232, %v436
        %v438 = vpop.f32.mrb[0].mxu0
        %439 = vmatprep.mubr.bf16.mxu0 0
        %440 = vmatmul.mubr.bf16.gmra.mrb[0].mxu0 %v333
        %v441 = vpop.f32.mrb[0].mxu0
        %v442 = vadd.f32 %v232, %v441
        %v443 = vpop.f32.mrb[0].mxu0
        %v444 = vpop.f32.mrb[0].mxu0
        %v445 = vadd.f32 %v232, %v444
        %v446 = vpop.f32.mrb[0].mxu0
        %447 = vmatprep.mubr.bf16.mxu0 0
        %448 = vmatmul.mubr.bf16.gmra.mrb[0].mxu0 %v336
        %v449 = vpop.f32.mrb[0].mxu0
        %v450 = vadd.f32 %v232, %v449
        %v451 = vpop.f32.mrb[0].mxu0
        %v452 = vpop.f32.mrb[0].mxu0
        %v453 = vadd.f32 %v232, %v452
        %v454 = vpop.f32.mrb[0].mxu0
        %455 = vmatprep.mubr.bf16.mxu0 0
        %456 = vmatmul.mubr.bf16.gmra.mrb[0].mxu0 %v339
        %v457 = vpop.f32.mrb[0].mxu0
        %v458 = vadd.f32 %v232, %v457
        %v459 = vpop.f32.mrb[0].mxu0
        %v460 = vpop.f32.mrb[0].mxu0
        %v461 = vadd.f32 %v232, %v460
        %v462 = vpop.f32.mrb[0].mxu0
        %463 = vmatprep.mubr.bf16.mxu0 0
        %464 = vmatmul.mubr.bf16.gmra.mrb[0].mxu0 %v342
        %v465 = vpop.f32.mrb[0].mxu0
        %v466 = vadd.f32 %v232, %v465
        %v467 = vpop.f32.mrb[0].mxu0
        %v468 = vpop.f32.mrb[0].mxu0
        %v469 = vadd.f32 %v232, %v468
        %v470 = vpop.f32.mrb[0].mxu0
        %471 = vmatprep.mubr.bf16.mxu0 0
        %472 = vmatmul.mubr.bf16.gmra.mrb[0].mxu0 %v345
        %v473 = vpop.f32.mrb[0].mxu0
        %v474 = vadd.f32 %v232, %v473
        %v475 = vpop.f32.mrb[0].mxu0
        %v476 = vpop.f32.mrb[0].mxu0
        %v477 = vadd.f32 %v232, %v476
        %v478 = vpop.f32.mrb[0].mxu0
        %479 = vmatprep.mubr.bf16.mxu0 0
        %480 = vmatmul.mubr.bf16.gmra.mrb[0].mxu0 %v348
        %v481 = vpop.f32.mrb[0].mxu0
        %v482 = vadd.f32 %v232, %v481
        %v483 = vpop.f32.mrb[0].mxu0
        %v484 = vpop.f32.mrb[0].mxu0
        %v485 = vadd.f32 %v232, %v484
        %v486 = vpop.f32.mrb[0].mxu0
        %487 = vmatprep.mubr.bf16.mxu0 0
        %488 = vmatmul.mubr.bf16.gmra.mrb[0].mxu0 %v351
        %v489 = vpop.f32.mrb[0].mxu0
        %v490 = vadd.f32 %v232, %v489
        %v491 = vpop.f32.mrb[0].mxu0
        %v492 = vpop.f32.mrb[0].mxu0
        %v493 = vadd.f32 %v232, %v492
        %v494 = vpop.f32.mrb[0].mxu0
        %495 = vmatprep.mubr.bf16.mxu0 0
        %496 = vmatmul.mubr.bf16.gmra.mrb[0].mxu0 %v354
        %v497 = vpop.f32.mrb[0].mxu0
        %v498 = vadd.f32 %v232, %v497
        %v499 = vpop.f32.mrb[0].mxu0
        %v500 = vpop.f32.mrb[0].mxu0
        %v501 = vadd.f32 %v232, %v500
        %v502 = vpop.f32.mrb[0].mxu0
        %503 = vmatprep.mubr.bf16.mxu0 0
        %504 = vmatmul.mubr.bf16.gmra.mrb[0].mxu0 %v357
        %v505 = vpop.f32.mrb[0].mxu0
        %v506 = vadd.f32 %v232, %v505
        %v507 = vpop.f32.mrb[0].mxu0
        %v508 = vpop.f32.mrb[0].mxu0
        %v509 = vadd.f32 %v232, %v508
        %v510 = vpop.f32.mrb[0].mxu0
        %511 = vmatprep.mubr.bf16.mxu0 0
        %512 = vmatmul.mubr.bf16.gmra.mrb[0].mxu0 %v360
        %v513 = vpop.f32.mrb[0].mxu0
        %v514 = vadd.f32 %v232, %v513
        %v515 = vpop.f32.mrb[0].mxu0
        %v516 = vpop.f32.mrb[0].mxu0
        %v517 = vadd.f32 %v232, %v516
        %v518 = vpop.f32.mrb[0].mxu0
        %519 = vmatprep.mubr.bf16.mxu0 0
        %520 = vmatmul.mubr.bf16.gmra.mrb[0].mxu0 %v363
        %v521 = vpop.f32.mrb[0].mxu0
        %v522 = vadd.f32 %v232, %v521
        %v523 = vpop.f32.mrb[0].mxu0
        %v524 = vpop.f32.mrb[0].mxu0
        %v525 = vadd.f32 %v232, %v524
        %v526 = vpop.f32.mrb[0].mxu0
        %527 = vmatprep.mubr.bf16.mxu0 0
        %528 = vmatmul.mubr.bf16.gmra.mrb[0].mxu0 %v366
        %v529 = vpop.f32.mrb[0].mxu0
        %v530 = vadd.f32 %v232, %v529
        %v531 = vpop.f32.mrb[0].mxu0
        %v532 = vpop.f32.mrb[0].mxu0
        %v533 = vadd.f32 %v232, %v532
        %v534 = vpop.f32.mrb[0].mxu0
        %535 = vdwg.mxu0
        %v536 = vmax.f32 %v410, 0.0
        %v537 = vmax.f32 %v413, 0.0
        %v538 = vmax.f32 %v418, 0.0
        %v539 = vmax.f32 %v421, 0.0
        %v540 = vmax.f32 %v426, 0.0
        %v541 = vmax.f32 %v429, 0.0
        %v542 = vmax.f32 %v434, 0.0
        %v543 = vmax.f32 %v437, 0.0
        %v544 = vmax.f32 %v442, 0.0
        %v545 = vmax.f32 %v445, 0.0
        %v546 = vmax.f32 %v450, 0.0
        %v547 = vmax.f32 %v453, 0.0
        %v548 = vmax.f32 %v458, 0.0
        %v549 = vmax.f32 %v461, 0.0
        %v550 = vmax.f32 %v466, 0.0
        %v551 = vmax.f32 %v469, 0.0
        %v552 = vmax.f32 %v474, 0.0
        %v553 = vmax.f32 %v477, 0.0
        %v554 = vmax.f32 %v482, 0.0
        %v555 = vmax.f32 %v485, 0.0
        %v556 = vmax.f32 %v490, 0.0
        %v557 = vmax.f32 %v493, 0.0
        %v558 = vmax.f32 %v498, 0.0
        %v559 = vmax.f32 %v501, 0.0
        %v560 = vmax.f32 %v506, 0.0
        %v561 = vmax.f32 %v509, 0.0
        %v562 = vmax.f32 %v514, 0.0
        %v563 = vmax.f32 %v517, 0.0
        %v564 = vmax.f32 %v522, 0.0
        %v565 = vmax.f32 %v525, 0.0
        %v566 = vmax.f32 %v530, 0.0
        %v567 = vmax.f32 %v533, 0.0
        %vm568 = vcmask 261120
        %569 = vst.msk [vmem:[%s172] sm:$0xff] %vm568, %v536
        %570 = vst.msk [vmem:[%s172 + $0x8] sm:$0xff] %vm568, %v537
        %571 = vst.msk [vmem:[%s172 + $0x10] sm:$0xff] %vm568, %v538
        %572 = vst.msk [vmem:[%s172 + $0x18] sm:$0xff] %vm568, %v539
        %573 = vst.msk [vmem:[%s172 + $0x20] sm:$0xff] %vm568, %v540
        %574 = vst.msk [vmem:[%s172 + $0x28] sm:$0xff] %vm568, %v541
        %575 = vst.msk [vmem:[%s172 + $0x30] sm:$0xff] %vm568, %v542
        %576 = vst.msk [vmem:[%s172 + $0x38] sm:$0xff] %vm568, %v543
        %577 = vst.msk [vmem:[%s172 + $0x40] sm:$0xff] %vm568, %v544
        %578 = vst.msk [vmem:[%s172 + $0x48] sm:$0xff] %vm568, %v545
        %579 = vst.msk [vmem:[%s172 + $0x50] sm:$0xff] %vm568, %v546
        %580 = vst.msk [vmem:[%s172 + $0x58] sm:$0xff] %vm568, %v547
        %581 = vst.msk [vmem:[%s172 + $0x60] sm:$0xff] %vm568, %v548
        %582 = vst.msk [vmem:[%s172 + $0x68] sm:$0xff] %vm568, %v549
        %583 = vst.msk [vmem:[%s172 + $0x70] sm:$0xff] %vm568, %v550
        %584 = vst.msk [vmem:[%s172 + $0x78] sm:$0xff] %vm568, %v551
        %585 = vst.msk [vmem:[%s172 + $0x80] sm:$0xff] %vm568, %v552
        %586 = vst.msk [vmem:[%s172 + $0x88] sm:$0xff] %vm568, %v553
        %587 = vst.msk [vmem:[%s172 + $0x90] sm:$0xff] %vm568, %v554
        %588 = vst.msk [vmem:[%s172 + $0x98] sm:$0xff] %vm568, %v555
        %589 = vst.msk [vmem:[%s172 + $0xa0] sm:$0xff] %vm568, %v556
        %590 = vst.msk [vmem:[%s172 + $0xa8] sm:$0xff] %vm568, %v557
        %591 = vst.msk [vmem:[%s172 + $0xb0] sm:$0xff] %vm568, %v558
        %592 = vst.msk [vmem:[%s172 + $0xb8] sm:$0xff] %vm568, %v559
        %593 = vst.msk [vmem:[%s172 + $0xc0] sm:$0xff] %vm568, %v560
        %594 = vst.msk [vmem:[%s172 + $0xc8] sm:$0xff] %vm568, %v561
        %595 = vst.msk [vmem:[%s172 + $0xd0] sm:$0xff] %vm568, %v562
        %596 = vst.msk [vmem:[%s172 + $0xd8] sm:$0xff] %vm568, %v563
        %597 = vst.msk [vmem:[%s172 + $0xe0] sm:$0xff] %vm568, %v564
        %598 = vst.msk [vmem:[%s172 + $0xe8] sm:$0xff] %vm568, %v565
        %599 = vst.msk [vmem:[%s172 + $0xf0] sm:$0xff] %vm568, %v566
        %600 = vst.msk [vmem:[%s172 + $0xf8] sm:$0xff] %vm568, %v567
        %s601 = sand.u32 %s90, 1
        %s602 = sand.u32 %s90, 1
        %s603 = smul.addr %s602, 256
        %s604 = scalar_lea.vmem [#allocation2], %s603
        // Predicated region
        $region33: #{forward.3} parent=31 // pred_check
          %p605 = pneg %p100
        $region34: #{forward.3} parent=31 // pred_check_branch
          %607 = sbr.rel (%p605) target = $region36
        $region35: #{forward.3} parent=31 // pred_region
          %s608 = smul.u32 32, %s14
          %s609 = ssub.s32 169, %s608
          %p610 = scmp.lt.s32.totalorder %s609, 32
          %s611 = scalar_select %p610, %s609, 32
          %s612 = smul.u32 128, %s611
          %p613 = scmp.ne.s32.totalorder 0, %s612
          %s614 = smul.addr %s608, 8
          %s615 = scalar_lea.vmem %s3, %s614
          // Predicated region
          $region37: #{forward.3} parent=35 // pred_check
            %p616 = pneg %p613
          $region38: #{forward.3} parent=35 // pred_check_branch
            %618 = sbr.rel (%p616) target = $region40
          $region39: #{forward.3} parent=35 // pred_region
            // Predicated region
            $region41: #{forward.3} parent=39 // pred_check
              _
            $region42: #{forward.3} parent=39 // pred_check_branch
              %620 = sbr.rel (0) target = $region44
            $region43: #{forward.3} parent=39 // pred_region
              // Predicated region
              $region63: #{forward.3} parent=43 // pred_check
                _
              $region64: #{forward.3} parent=43 // pred_check_branch
                %731 = sbr.rel (0) target = $region66
              $region65: #{forward.3} parent=43 // pred_region
                %s732 = sshrl.u32 %s611, 5
                // While loop
                $region67: #{forward.3} parent=65 // loop_pre_header
                  _
                $region68: #{forward.3} parent=65 // loop_header
                  %s734 = sphi 0, %s736
                  %p735 = scmp.ge.s32.totalorder %s734, %s732
                  %s739 = sphi 0, %s808
                  %s740 = sphi %s604, %s811
                  %s741 = sphi %s615, %s812
                $region69: #{forward.3} parent=65 // loop_header_branch
                  %738 = sbr.rel (%p735) target = $region73
                $region70: #{forward.3} parent=65 // loop_body
                  %v742 = vld [vmem:[%s740] sm:$0xff]
                  %743 = vst [vmem:[%s741] sm:$0xff] %v742
                  %v744 = vld [vmem:[%s740 + $0x8] sm:$0xff]
                  %745 = vst [vmem:[%s741 + $0x8] sm:$0xff] %v744
                  %v746 = vld [vmem:[%s740 + $0x10] sm:$0xff]
                  %747 = vst [vmem:[%s741 + $0x10] sm:$0xff] %v746
                  %v748 = vld [vmem:[%s740 + $0x18] sm:$0xff]
                  %749 = vst [vmem:[%s741 + $0x18] sm:$0xff] %v748
                  %v750 = vld [vmem:[%s740 + $0x20] sm:$0xff]
                  %751 = vst [vmem:[%s741 + $0x20] sm:$0xff] %v750
                  %v752 = vld [vmem:[%s740 + $0x28] sm:$0xff]
                  %753 = vst [vmem:[%s741 + $0x28] sm:$0xff] %v752
                  %v754 = vld [vmem:[%s740 + $0x30] sm:$0xff]
                  %755 = vst [vmem:[%s741 + $0x30] sm:$0xff] %v754
                  %v756 = vld [vmem:[%s740 + $0x38] sm:$0xff]
                  %757 = vst [vmem:[%s741 + $0x38] sm:$0xff] %v756
                  %v758 = vld [vmem:[%s740 + $0x40] sm:$0xff]
                  %759 = vst [vmem:[%s741 + $0x40] sm:$0xff] %v758
                  %v760 = vld [vmem:[%s740 + $0x48] sm:$0xff]
                  %761 = vst [vmem:[%s741 + $0x48] sm:$0xff] %v760
                  %v762 = vld [vmem:[%s740 + $0x50] sm:$0xff]
                  %763 = vst [vmem:[%s741 + $0x50] sm:$0xff] %v762
                  %v764 = vld [vmem:[%s740 + $0x58] sm:$0xff]
                  %765 = vst [vmem:[%s741 + $0x58] sm:$0xff] %v764
                  %v766 = vld [vmem:[%s740 + $0x60] sm:$0xff]
                  %767 = vst [vmem:[%s741 + $0x60] sm:$0xff] %v766
                  %v768 = vld [vmem:[%s740 + $0x68] sm:$0xff]
                  %769 = vst [vmem:[%s741 + $0x68] sm:$0xff] %v768
                  %v770 = vld [vmem:[%s740 + $0x70] sm:$0xff]
                  %771 = vst [vmem:[%s741 + $0x70] sm:$0xff] %v770
                  %v772 = vld [vmem:[%s740 + $0x78] sm:$0xff]
                  %773 = vst [vmem:[%s741 + $0x78] sm:$0xff] %v772
                  %v774 = vld [vmem:[%s740 + $0x80] sm:$0xff]
                  %775 = vst [vmem:[%s741 + $0x80] sm:$0xff] %v774
                  %v776 = vld [vmem:[%s740 + $0x88] sm:$0xff]
                  %777 = vst [vmem:[%s741 + $0x88] sm:$0xff] %v776
                  %v778 = vld [vmem:[%s740 + $0x90] sm:$0xff]
                  %779 = vst [vmem:[%s741 + $0x90] sm:$0xff] %v778
                  %v780 = vld [vmem:[%s740 + $0x98] sm:$0xff]
                  %781 = vst [vmem:[%s741 + $0x98] sm:$0xff] %v780
                  %v782 = vld [vmem:[%s740 + $0xa0] sm:$0xff]
                  %783 = vst [vmem:[%s741 + $0xa0] sm:$0xff] %v782
                  %v784 = vld [vmem:[%s740 + $0xa8] sm:$0xff]
                  %785 = vst [vmem:[%s741 + $0xa8] sm:$0xff] %v784
                  %v786 = vld [vmem:[%s740 + $0xb0] sm:$0xff]
                  %787 = vst [vmem:[%s741 + $0xb0] sm:$0xff] %v786
                  %v788 = vld [vmem:[%s740 + $0xb8] sm:$0xff]
                  %789 = vst [vmem:[%s741 + $0xb8] sm:$0xff] %v788
                  %v790 = vld [vmem:[%s740 + $0xc0] sm:$0xff]
                  %791 = vst [vmem:[%s741 + $0xc0] sm:$0xff] %v790
                  %v792 = vld [vmem:[%s740 + $0xc8] sm:$0xff]
                  %793 = vst [vmem:[%s741 + $0xc8] sm:$0xff] %v792
                  %v794 = vld [vmem:[%s740 + $0xd0] sm:$0xff]
                  %795 = vst [vmem:[%s741 + $0xd0] sm:$0xff] %v794
                  %v796 = vld [vmem:[%s740 + $0xd8] sm:$0xff]
                  %797 = vst [vmem:[%s741 + $0xd8] sm:$0xff] %v796
                  %v798 = vld [vmem:[%s740 + $0xe0] sm:$0xff]
                  %799 = vst [vmem:[%s741 + $0xe0] sm:$0xff] %v798
                  %v800 = vld [vmem:[%s740 + $0xe8] sm:$0xff]
                  %801 = vst [vmem:[%s741 + $0xe8] sm:$0xff] %v800
                  %v802 = vld [vmem:[%s740 + $0xf0] sm:$0xff]
                  %803 = vst [vmem:[%s741 + $0xf0] sm:$0xff] %v802
                  %v804 = vld [vmem:[%s740 + $0xf8] sm:$0xff]
                  %805 = vst [vmem:[%s741 + $0xf8] sm:$0xff] %v804
                  %s806 = sadd.s32 1, %s739
                  %p807 = scmp.ge.s32.totalorder %s806, %s732
                  %s808 = scalar_select %p807, 0, %s806
                  %s809 = smul.u32 %s808, 256
                  %s810 = smul.u32 %s808, 256
                  %s811 = scalar_lea.vmem %s604, %s809 [#allocation2]
                  %s812 = scalar_lea.vmem %s615, %s810
                $region71: #{forward.3} parent=65 // loop_footer
                  %s736 = sadd.s32 %s734, 1
                $region72: #{forward.3} parent=65 // loop_footer_branch
                  %733 = sbr.rel target = $region68
                $region73: #{forward.3} parent=65 // loop_exit
                  _
                %s813 = sshrl.u32 %s611, 5
                %s814 = sand.u32 %s611, 31
                %s815 = smul.u32 %s813, 32
                %s816 = smul.u32 8, %s815
                %s817 = scalar_lea.vmem %s604, %s816 [#allocation2]
                %s818 = smul.u32 8, %s815
                %s819 = scalar_lea.vmem %s615, %s818
                // While loop
                $region74: #{forward.3} parent=65 // loop_pre_header
                  _
                $region75: #{forward.3} parent=65 // loop_header
                  %s821 = sphi 0, %s823
                  %p822 = scmp.ge.s32.totalorder %s821, %s814
                  %s826 = sphi 0, %s833
                  %s827 = sphi %s817, %s836
                  %s828 = sphi %s819, %s837
                $region76: #{forward.3} parent=65 // loop_header_branch
                  %825 = sbr.rel (%p822) target = $region80
                $region77: #{forward.3} parent=65 // loop_body
                  %v829 = vld [vmem:[%s827] sm:$0xff]
                  %830 = vst [vmem:[%s828] sm:$0xff] %v829
                  %s831 = sadd.s32 1, %s826
                  %p832 = scmp.ge.s32.totalorder %s831, %s814
                  %s833 = scalar_select %p832, 0, %s831
                  %s834 = smul.u32 %s833, 8
                  %s835 = smul.u32 %s833, 8
                  %s836 = scalar_lea.vmem %s817, %s834 [#allocation2]
                  %s837 = scalar_lea.vmem %s819, %s835
                $region78: #{forward.3} parent=65 // loop_footer
                  %s823 = sadd.s32 %s821, 1
                $region79: #{forward.3} parent=65 // loop_footer_branch
                  %820 = sbr.rel target = $region75
                $region80: #{forward.3} parent=65 // loop_exit
                  _
              $region66: #{forward.3} parent=43 // pred_fallthru
                _
              // Predicated region
              $region81: #{forward.3} parent=43 // pred_check
                _
              $region82: #{forward.3} parent=43 // pred_check_branch
                %839 = sbr.rel target = $region84
              $region83: #{forward.3} parent=43 // pred_region
                _
              $region84: #{forward.3} parent=43 // pred_fallthru
                _
            $region44: #{forward.3} parent=39 // pred_fallthru
              _
            // Predicated region
            $region45: #{forward.3} parent=39 // pred_check
              _
            $region46: #{forward.3} parent=39 // pred_check_branch
              %622 = sbr.rel target = $region48
            $region47: #{forward.3} parent=39 // pred_region
              %s624 = sshrl.u32 %s611, 5
              // While loop
              $region49: #{forward.3} parent=47 // loop_pre_header
                _
              $region50: #{forward.3} parent=47 // loop_header
                %s626 = sphi 0, %s628
                %p627 = scmp.ge.s32.totalorder %s626, %s624
                %s631 = sphi 0, %s700
                %s632 = sphi %s604, %s703
                %s633 = sphi %s615, %s704
              $region51: #{forward.3} parent=47 // loop_header_branch
                %630 = sbr.rel (%p627) target = $region55
              $region52: #{forward.3} parent=47 // loop_body
                %v634 = vld [vmem:[%s632] sm:$0xff]
                %635 = vst [vmem:[%s633] sm:$0xff] %v634
                %v636 = vld [vmem:[%s632 + $0x8] sm:$0xff]
                %637 = vst [vmem:[%s633 + $0x8] sm:$0xff] %v636
                %v638 = vld [vmem:[%s632 + $0x10] sm:$0xff]
                %639 = vst [vmem:[%s633 + $0x10] sm:$0xff] %v638
                %v640 = vld [vmem:[%s632 + $0x18] sm:$0xff]
                %641 = vst [vmem:[%s633 + $0x18] sm:$0xff] %v640
                %v642 = vld [vmem:[%s632 + $0x20] sm:$0xff]
                %643 = vst [vmem:[%s633 + $0x20] sm:$0xff] %v642
                %v644 = vld [vmem:[%s632 + $0x28] sm:$0xff]
                %645 = vst [vmem:[%s633 + $0x28] sm:$0xff] %v644
                %v646 = vld [vmem:[%s632 + $0x30] sm:$0xff]
                %647 = vst [vmem:[%s633 + $0x30] sm:$0xff] %v646
                %v648 = vld [vmem:[%s632 + $0x38] sm:$0xff]
                %649 = vst [vmem:[%s633 + $0x38] sm:$0xff] %v648
                %v650 = vld [vmem:[%s632 + $0x40] sm:$0xff]
                %651 = vst [vmem:[%s633 + $0x40] sm:$0xff] %v650
                %v652 = vld [vmem:[%s632 + $0x48] sm:$0xff]
                %653 = vst [vmem:[%s633 + $0x48] sm:$0xff] %v652
                %v654 = vld [vmem:[%s632 + $0x50] sm:$0xff]
                %655 = vst [vmem:[%s633 + $0x50] sm:$0xff] %v654
                %v656 = vld [vmem:[%s632 + $0x58] sm:$0xff]
                %657 = vst [vmem:[%s633 + $0x58] sm:$0xff] %v656
                %v658 = vld [vmem:[%s632 + $0x60] sm:$0xff]
                %659 = vst [vmem:[%s633 + $0x60] sm:$0xff] %v658
                %v660 = vld [vmem:[%s632 + $0x68] sm:$0xff]
                %661 = vst [vmem:[%s633 + $0x68] sm:$0xff] %v660
                %v662 = vld [vmem:[%s632 + $0x70] sm:$0xff]
                %663 = vst [vmem:[%s633 + $0x70] sm:$0xff] %v662
                %v664 = vld [vmem:[%s632 + $0x78] sm:$0xff]
                %665 = vst [vmem:[%s633 + $0x78] sm:$0xff] %v664
                %v666 = vld [vmem:[%s632 + $0x80] sm:$0xff]
                %667 = vst [vmem:[%s633 + $0x80] sm:$0xff] %v666
                %v668 = vld [vmem:[%s632 + $0x88] sm:$0xff]
                %669 = vst [vmem:[%s633 + $0x88] sm:$0xff] %v668
                %v670 = vld [vmem:[%s632 + $0x90] sm:$0xff]
                %671 = vst [vmem:[%s633 + $0x90] sm:$0xff] %v670
                %v672 = vld [vmem:[%s632 + $0x98] sm:$0xff]
                %673 = vst [vmem:[%s633 + $0x98] sm:$0xff] %v672
                %v674 = vld [vmem:[%s632 + $0xa0] sm:$0xff]
                %675 = vst [vmem:[%s633 + $0xa0] sm:$0xff] %v674
                %v676 = vld [vmem:[%s632 + $0xa8] sm:$0xff]
                %677 = vst [vmem:[%s633 + $0xa8] sm:$0xff] %v676
                %v678 = vld [vmem:[%s632 + $0xb0] sm:$0xff]
                %679 = vst [vmem:[%s633 + $0xb0] sm:$0xff] %v678
                %v680 = vld [vmem:[%s632 + $0xb8] sm:$0xff]
                %681 = vst [vmem:[%s633 + $0xb8] sm:$0xff] %v680
                %v682 = vld [vmem:[%s632 + $0xc0] sm:$0xff]
                %683 = vst [vmem:[%s633 + $0xc0] sm:$0xff] %v682
                %v684 = vld [vmem:[%s632 + $0xc8] sm:$0xff]
                %685 = vst [vmem:[%s633 + $0xc8] sm:$0xff] %v684
                %v686 = vld [vmem:[%s632 + $0xd0] sm:$0xff]
                %687 = vst [vmem:[%s633 + $0xd0] sm:$0xff] %v686
                %v688 = vld [vmem:[%s632 + $0xd8] sm:$0xff]
                %689 = vst [vmem:[%s633 + $0xd8] sm:$0xff] %v688
                %v690 = vld [vmem:[%s632 + $0xe0] sm:$0xff]
                %691 = vst [vmem:[%s633 + $0xe0] sm:$0xff] %v690
                %v692 = vld [vmem:[%s632 + $0xe8] sm:$0xff]
                %693 = vst [vmem:[%s633 + $0xe8] sm:$0xff] %v692
                %v694 = vld [vmem:[%s632 + $0xf0] sm:$0xff]
                %695 = vst [vmem:[%s633 + $0xf0] sm:$0xff] %v694
                %v696 = vld [vmem:[%s632 + $0xf8] sm:$0xff]
                %697 = vst [vmem:[%s633 + $0xf8] sm:$0xff] %v696
                %s698 = sadd.s32 1, %s631
                %p699 = scmp.ge.s32.totalorder %s698, %s624
                %s700 = scalar_select %p699, 0, %s698
                %s701 = smul.u32 %s700, 256
                %s702 = smul.u32 %s700, 256
                %s703 = scalar_lea.vmem %s604, %s701 [#allocation2]
                %s704 = scalar_lea.vmem %s615, %s702
              $region53: #{forward.3} parent=47 // loop_footer
                %s628 = sadd.s32 %s626, 1
              $region54: #{forward.3} parent=47 // loop_footer_branch
                %625 = sbr.rel target = $region50
              $region55: #{forward.3} parent=47 // loop_exit
                _
              %s705 = sshrl.u32 %s611, 5
              %s706 = sand.u32 %s611, 31
              %s707 = smul.u32 %s705, 32
              %s708 = smul.u32 8, %s707
              %s709 = scalar_lea.vmem %s604, %s708 [#allocation2]
              %s710 = smul.u32 8, %s707
              %s711 = scalar_lea.vmem %s615, %s710
              // While loop
              $region56: #{forward.3} parent=47 // loop_pre_header
                _
              $region57: #{forward.3} parent=47 // loop_header
                %s713 = sphi 0, %s715
                %p714 = scmp.ge.s32.totalorder %s713, %s706
                %s718 = sphi 0, %s725
                %s719 = sphi %s709, %s728
                %s720 = sphi %s711, %s729
              $region58: #{forward.3} parent=47 // loop_header_branch
                %717 = sbr.rel (%p714) target = $region62
              $region59: #{forward.3} parent=47 // loop_body
                %v721 = vld [vmem:[%s719] sm:$0xff]
                %722 = vst [vmem:[%s720] sm:$0xff] %v721
                %s723 = sadd.s32 1, %s718
                %p724 = scmp.ge.s32.totalorder %s723, %s706
                %s725 = scalar_select %p724, 0, %s723
                %s726 = smul.u32 %s725, 8
                %s727 = smul.u32 %s725, 8
                %s728 = scalar_lea.vmem %s709, %s726 [#allocation2]
                %s729 = scalar_lea.vmem %s711, %s727
              $region60: #{forward.3} parent=47 // loop_footer
                %s715 = sadd.s32 %s713, 1
              $region61: #{forward.3} parent=47 // loop_footer_branch
                %712 = sbr.rel target = $region57
              $region62: #{forward.3} parent=47 // loop_exit
                _
            $region48: #{forward.3} parent=39 // pred_fallthru
              _
          $region40: #{forward.3} parent=35 // pred_fallthru
            _
          %840 = vnop
        $region36: #{forward.3} parent=31 // pred_fallthru
          _
      $region32: #{forward.3} parent=5 // pred_fallthru
        _
      %p841 = scmp.le.s32.totalorder 2, %s9
      // Predicated region
      $region85: #{forward.3} parent=5 // pred_check
        %p842 = pneg %p841
      $region86: #{forward.3} parent=5 // pred_check_branch
        %844 = sbr.rel (%p842) target = $region88
      $region87: #{forward.3} parent=5 // pred_region
        %s845 = ssub.s32 %s9, 2
        // Predicated region
        $region89: #{forward.3} parent=87 // pred_check
          %p846 = pneg %p106
        $region90: #{forward.3} parent=87 // pred_check_branch
          %848 = sbr.rel (%p846) target = $region92
        $region91: #{forward.3} parent=87 // pred_region
          %s849 = sand.u32 %s91, 1
          %s850 = sand.u32 %s91, 1
          %s851 = smul.addr %s850, 256
          %s852 = scalar_lea.vmem [#allocation2], %s851
        $region92: #{forward.3} parent=87 // pred_fallthru
          _
      $region88: #{forward.3} parent=5 // pred_fallthru
        _
    $region6: #{forward.3} parent=1 // loop_footer
      %s13 = sadd.s32 1, %s9
    $region7: #{forward.3} parent=1 // loop_footer_branch
      %8 = sbr.rel target = $region3
    $region8: #{forward.3} parent=1 // loop_exit
      _

// kernel: forward.4
$region0: #{forward.4}
  #allocation0 [shape = 'u32[]', space=smem, size = 0x4, offset = 0x4, fixed_abs, tag = 'smem constant byte address 0x4 - core index']
  #allocation1 [shape = 'u32[144,128]{1,0:T(1,128)}', space=vmem, size = 0x12000, scoped, tag = 'internal scratch']
  %s0 = inlined_call_operand.vmem [shape: bf16[242,288], index: 0, kind: input, shape index: {}]
  %s1 = inlined_call_operand.vmem [shape: bf16[288,64], index: 1, kind: input, shape index: {}]
  %s2 = inlined_call_operand.vmem [shape: f32[1,64], index: 2, kind: input, shape index: {}]
  %s3 = inlined_call_operand.vmem [shape: f32[242,64], index: 3, kind: output, shape index: {}]
  %s4 = sld [smem:[#allocation0]]
  $region22: #{forward.4} parent=0
    _
  %s6 = ssub.s32 1, %s4
  %s7 = scalar_select 0, %s6, %s4
  // Predicated region
  $region2: #{forward.4} parent=0 // pred_check
    _
  $region3: #{forward.4} parent=0 // pred_check_branch
    %9 = sbr.rel (0) target = $region5
  $region4: #{forward.4} parent=0 // pred_region
    _
  $region5: #{forward.4} parent=0 // pred_fallthru
    _
  // Predicated region
  $region6: #{forward.4} parent=0 // pred_check
    _
  $region7: #{forward.4} parent=0 // pred_check_branch
    %11 = sbr.rel (0) target = $region9
  $region8: #{forward.4} parent=0 // pred_region
    _
  $region9: #{forward.4} parent=0 // pred_fallthru
    _
  // Predicated region
  $region10: #{forward.4} parent=0 // pred_check
    _
  $region11: #{forward.4} parent=0 // pred_check_branch
    %13 = sbr.rel (0) target = $region13
  $region12: #{forward.4} parent=0 // pred_region
    _
  $region13: #{forward.4} parent=0 // pred_fallthru
    _
  %v15 = vld [vmem:[%s0] sm:$0xff]
  %v16 = vld [vmem:[%s0 + $0x8] sm:$0xf]
  %v17 = vld [vmem:[%s0 + $0xc] sm:$0xff]
  %v18 = vld [vmem:[%s0 + $0x14] sm:$0xf]
  %v19 = vld [vmem:[%s0 + $0x18] sm:$0xff]
  %v20 = vld [vmem:[%s0 + $0x20] sm:$0xf]
  %v21 = vld [vmem:[%s0 + $0x24] sm:$0xff]
  %v22 = vld [vmem:[%s0 + $0x2c] sm:$0xf]
  %v23 = vld [vmem:[%s0 + $0x30] sm:$0xff]
  %v24 = vld [vmem:[%s0 + $0x38] sm:$0xf]
  %v25 = vld [vmem:[%s0 + $0x3c] sm:$0xff]
  %v26 = vld [vmem:[%s0 + $0x44] sm:$0xf]
  %v27 = vld [vmem:[%s0 + $0x48] sm:$0xff]
  %v28 = vld [vmem:[%s0 + $0x50] sm:$0xf]
  %v29 = vld [vmem:[%s0 + $0x54] sm:$0xff]
  %v30 = vld [vmem:[%s0 + $0x5c] sm:$0xf]
  %v31 = vld [vmem:[%s0 + $0x60] sm:$0xff]
  %v32 = vld [vmem:[%s0 + $0x68] sm:$0xf]
  %v33 = vld [vmem:[%s0 + $0x6c] sm:$0xff]
  %v34 = vld [vmem:[%s0 + $0x74] sm:$0xf]
  %v35 = vld [vmem:[%s0 + $0x78] sm:$0xff]
  %v36 = vld [vmem:[%s0 + $0x80] sm:$0xf]
  %v37 = vld [vmem:[%s0 + $0x84] sm:$0xff]
  %v38 = vld [vmem:[%s0 + $0x8c] sm:$0xf]
  %v39 = vld [vmem:[%s0 + $0x90] sm:$0xff]
  %v40 = vld [vmem:[%s0 + $0x98] sm:$0xf]
  %v41 = vld [vmem:[%s0 + $0x9c] sm:$0xff]
  %v42 = vld [vmem:[%s0 + $0xa4] sm:$0xf]
  %v43 = vld [vmem:[%s0 + $0xa8] sm:$0xff]
  %v44 = vld [vmem:[%s0 + $0xb0] sm:$0xf]
  %v45 = vld [vmem:[%s0 + $0xb4] sm:$0xff]
  %v46 = vld [vmem:[%s0 + $0xbc] sm:$0xf]
  %v47 = vld [vmem:[%s0 + $0xc0] sm:$0xff]
  %v48 = vld [vmem:[%s0 + $0xc8] sm:$0xf]
  %v49 = vld [vmem:[%s0 + $0xcc] sm:$0xff]
  %v50 = vld [vmem:[%s0 + $0xd4] sm:$0xf]
  %v51 = vld [vmem:[%s0 + $0xd8] sm:$0xff]
  %v52 = vld [vmem:[%s0 + $0xe0] sm:$0xf]
  %v53 = vld [vmem:[%s0 + $0xe4] sm:$0xff]
  %v54 = vld [vmem:[%s0 + $0xec] sm:$0xf]
  %v55 = vld [vmem:[%s0 + $0xf0] sm:$0xff]
  %v56 = vld [vmem:[%s0 + $0xf8] sm:$0xf]
  %v57 = vld [vmem:[%s0 + $0xfc] sm:$0xff]
  %v58 = vld [vmem:[%s0 + $0x104] sm:$0xf]
  %v59 = vld [vmem:[%s0 + $0x108] sm:$0xff]
  %v60 = vld [vmem:[%s0 + $0x110] sm:$0xf]
  %v61 = vld [vmem:[%s0 + $0x114] sm:$0xff]
  %v62 = vld [vmem:[%s0 + $0x11c] sm:$0xf]
  %v63 = vld [vmem:[%s0 + $0x120] sm:$0xff]
  %v64 = vld [vmem:[%s0 + $0x128] sm:$0xf]
  %v65 = vld [vmem:[%s0 + $0x12c] sm:$0xff]
  %v66 = vld [vmem:[%s0 + $0x134] sm:$0xf]
  %v67 = vld [vmem:[%s0 + $0x138] sm:$0xff]
  %v68 = vld [vmem:[%s0 + $0x140] sm:$0xf]
  %v69 = vld [vmem:[%s0 + $0x144] sm:$0xff]
  %v70 = vld [vmem:[%s0 + $0x14c] sm:$0xf]
  %v71 = vld [vmem:[%s0 + $0x150] sm:$0xff]
  %v72 = vld [vmem:[%s0 + $0x158] sm:$0xf]
  %v73 = vld [vmem:[%s0 + $0x15c] sm:$0xff]
  %v74 = vld [vmem:[%s0 + $0x164] sm:$0xf]
  %v75 = vld [vmem:[%s0 + $0x168] sm:$0x11]
  %v76 = vld [vmem:[%s0 + $0x170] sm:$0x1]
  %v77 = vld [vmem:[%s1] sm:$0xf]
  %v78 = vld [vmem:[%s1 + $0x4] sm:$0xf]
  %v79 = vld [vmem:[%s1 + $0x8] sm:$0xf]
  %v80 = vld [vmem:[%s1 + $0xc] sm:$0xf]
  %v81 = vld [vmem:[%s1 + $0x10] sm:$0xf]
  %v82 = vld [vmem:[%s1 + $0x14] sm:$0xf]
  %v83 = vld [vmem:[%s1 + $0x18] sm:$0xf]
  %v84 = vld [vmem:[%s1 + $0x1c] sm:$0xf]
  %v85 = vld [vmem:[%s1 + $0x20] sm:$0xf]
  %v86 = vld [vmem:[%s1 + $0x24] sm:$0xf]
  %v87 = vld [vmem:[%s1 + $0x28] sm:$0xf]
  %v88 = vld [vmem:[%s1 + $0x2c] sm:$0xf]
  %v89 = vld [vmem:[%s1 + $0x30] sm:$0xf]
  %v90 = vld [vmem:[%s1 + $0x34] sm:$0xf]
  %v91 = vld [vmem:[%s1 + $0x38] sm:$0xf]
  %v92 = vld [vmem:[%s1 + $0x3c] sm:$0xf]
  %v93 = vld [vmem:[%s1 + $0x40] sm:$0xf]
  %v94 = vld [vmem:[%s1 + $0x44] sm:$0xf]
  %v95 = vld [vmem:[%s1 + $0x48] sm:$0xf]
  %v96 = vld [vmem:[%s1 + $0x4c] sm:$0xf]
  %v97 = vld [vmem:[%s1 + $0x50] sm:$0xf]
  %v98 = vld [vmem:[%s1 + $0x54] sm:$0xf]
  %v99 = vld [vmem:[%s1 + $0x58] sm:$0xf]
  %v100 = vld [vmem:[%s1 + $0x5c] sm:$0xf]
  %v101 = vld [vmem:[%s1 + $0x60] sm:$0xf]
  %v102 = vld [vmem:[%s1 + $0x64] sm:$0xf]
  %v103 = vld [vmem:[%s1 + $0x68] sm:$0xf]
  %v104 = vld [vmem:[%s1 + $0x6c] sm:$0xf]
  %v105 = vld [vmem:[%s1 + $0x70] sm:$0xf]
  %v106 = vld [vmem:[%s1 + $0x74] sm:$0xf]
  %v107 = vld [vmem:[%s1 + $0x78] sm:$0xf]
  %v108 = vld [vmem:[%s1 + $0x7c] sm:$0xf]
  %v109 = vld [vmem:[%s1 + $0x80] sm:$0xf]
  %v110 = vld [vmem:[%s1 + $0x84] sm:$0xf]
  %v111 = vld [vmem:[%s1 + $0x88] sm:$0xf]
  %v112 = vld [vmem:[%s1 + $0x8c] sm:$0xf]
  %v113 = vld [vmem:[%s2] sm:$0x1]
  %v115 = vlaneseq
  %v116 = vshrl.u32 %v115, 7
  %v117 = vsub.s32 0, %v116
  %v118 = vrot.slane %v113, %v117
  %v182 = vunpack.c.l.b16 %v15
  %v183 = vunpack.c.h.b16 %v15
  %v184 = vunpack.c.l.b16 %v16
  %v185 = vunpack.c.l.b16 %v17
  %v186 = vunpack.c.h.b16 %v17
  %v187 = vunpack.c.l.b16 %v18
  %v188 = vunpack.c.l.b16 %v19
  %v189 = vunpack.c.h.b16 %v19
  %v190 = vunpack.c.l.b16 %v20
  %v191 = vunpack.c.l.b16 %v21
  %v192 = vunpack.c.h.b16 %v21
  %v193 = vunpack.c.l.b16 %v22
  %v194 = vunpack.c.l.b16 %v23
  %v195 = vunpack.c.h.b16 %v23
  %v196 = vunpack.c.l.b16 %v24
  %v197 = vunpack.c.l.b16 %v25
  %v198 = vunpack.c.h.b16 %v25
  %v199 = vunpack.c.l.b16 %v26
  %v200 = vunpack.c.l.b16 %v27
  %v201 = vunpack.c.h.b16 %v27
  %v202 = vunpack.c.l.b16 %v28
  %v203 = vunpack.c.l.b16 %v29
  %v204 = vunpack.c.h.b16 %v29
  %v205 = vunpack.c.l.b16 %v30
  %v206 = vunpack.c.l.b16 %v31
  %v207 = vunpack.c.h.b16 %v31
  %v208 = vunpack.c.l.b16 %v32
  %v209 = vunpack.c.l.b16 %v33
  %v210 = vunpack.c.h.b16 %v33
  %v211 = vunpack.c.l.b16 %v34
  %v212 = vunpack.c.l.b16 %v35
  %v213 = vunpack.c.h.b16 %v35
  %v214 = vunpack.c.l.b16 %v36
  %v215 = vunpack.c.l.b16 %v37
  %v216 = vunpack.c.h.b16 %v37
  %v217 = vunpack.c.l.b16 %v38
  %v218 = vunpack.c.l.b16 %v39
  %v219 = vunpack.c.h.b16 %v39
  %v220 = vunpack.c.l.b16 %v40
  %v221 = vunpack.c.l.b16 %v41
  %v222 = vunpack.c.h.b16 %v41
  %v223 = vunpack.c.l.b16 %v42
  %v224 = vunpack.c.l.b16 %v43
  %v225 = vunpack.c.h.b16 %v43
  %v226 = vunpack.c.l.b16 %v44
  %v227 = vunpack.c.l.b16 %v45
  %v228 = vunpack.c.h.b16 %v45
  %v229 = vunpack.c.l.b16 %v46
  %v230 = vunpack.c.l.b16 %v47
  %v231 = vunpack.c.h.b16 %v47
  %v232 = vunpack.c.l.b16 %v48
  %v233 = vunpack.c.l.b16 %v49
  %v234 = vunpack.c.h.b16 %v49
  %v235 = vunpack.c.l.b16 %v50
  %v236 = vunpack.c.l.b16 %v51
  %v237 = vunpack.c.h.b16 %v51
  %v238 = vunpack.c.l.b16 %v52
  %v239 = vunpack.c.l.b16 %v53
  %v240 = vunpack.c.h.b16 %v53
  %v241 = vunpack.c.l.b16 %v54
  %v242 = vunpack.c.l.b16 %v55
  %v243 = vunpack.c.h.b16 %v55
  %v244 = vunpack.c.l.b16 %v56
  %v245 = vunpack.c.l.b16 %v57
  %v246 = vunpack.c.h.b16 %v57
  %v247 = vunpack.c.l.b16 %v58
  %v248 = vunpack.c.l.b16 %v59
  %v249 = vunpack.c.h.b16 %v59
  %v250 = vunpack.c.l.b16 %v60
  %v251 = vunpack.c.l.b16 %v61
  %v252 = vunpack.c.h.b16 %v61
  %v253 = vunpack.c.l.b16 %v62
  %v254 = vunpack.c.l.b16 %v63
  %v255 = vunpack.c.h.b16 %v63
  %v256 = vunpack.c.l.b16 %v64
  %v257 = vunpack.c.l.b16 %v65
  %v258 = vunpack.c.h.b16 %v65
  %v259 = vunpack.c.l.b16 %v66
  %v260 = vunpack.c.l.b16 %v67
  %v261 = vunpack.c.h.b16 %v67
  %v262 = vunpack.c.l.b16 %v68
  %v263 = vunpack.c.l.b16 %v69
  %v264 = vunpack.c.h.b16 %v69
  %v265 = vunpack.c.l.b16 %v70
  %v266 = vunpack.c.l.b16 %v71
  %v267 = vunpack.c.h.b16 %v71
  %v268 = vunpack.c.l.b16 %v72
  %v269 = vunpack.c.l.b16 %v73
  %v270 = vunpack.c.h.b16 %v73
  %v271 = vunpack.c.l.b16 %v74
  %v272 = vunpack.c.l.b16 %v75
  %v273 = vunpack.c.h.b16 %v75
  %v274 = vunpack.c.l.b16 %v76
  %v275 = vpack.c.b16 %v185, %v182
  %v276 = vpack.c.b16 %v186, %v183
  %v277 = vpack.c.b16 %v187, %v184
  %v278 = vpack.c.b16 %v191, %v188
  %v279 = vpack.c.b16 %v192, %v189
  %v280 = vpack.c.b16 %v193, %v190
  %v281 = vpack.c.b16 %v197, %v194
  %v282 = vpack.c.b16 %v198, %v195
  %v283 = vpack.c.b16 %v199, %v196
  %v284 = vpack.c.b16 %v203, %v200
  %v285 = vpack.c.b16 %v204, %v201
  %v286 = vpack.c.b16 %v205, %v202
  %v287 = vpack.c.b16 %v209, %v206
  %v288 = vpack.c.b16 %v210, %v207
  %v289 = vpack.c.b16 %v211, %v208
  %v290 = vpack.c.b16 %v215, %v212
  %v291 = vpack.c.b16 %v216, %v213
  %v292 = vpack.c.b16 %v217, %v214
  %v293 = vpack.c.b16 %v221, %v218
  %v294 = vpack.c.b16 %v222, %v219
  %v295 = vpack.c.b16 %v223, %v220
  %v296 = vpack.c.b16 %v227, %v224
  %v297 = vpack.c.b16 %v228, %v225
  %v298 = vpack.c.b16 %v229, %v226
  %v299 = vpack.c.b16 %v233, %v230
  %v300 = vpack.c.b16 %v234, %v231
  %v301 = vpack.c.b16 %v235, %v232
  %v302 = vpack.c.b16 %v239, %v236
  %v303 = vpack.c.b16 %v240, %v237
  %v304 = vpack.c.b16 %v241, %v238
  %v305 = vpack.c.b16 %v245, %v242
  %v306 = vpack.c.b16 %v246, %v243
  %v307 = vpack.c.b16 %v247, %v244
  %v308 = vpack.c.b16 %v251, %v248
  %v309 = vpack.c.b16 %v252, %v249
  %v310 = vpack.c.b16 %v253, %v250
  %v311 = vpack.c.b16 %v257, %v254
  %v312 = vpack.c.b16 %v258, %v255
  %v313 = vpack.c.b16 %v259, %v256
  %v314 = vpack.c.b16 %v263, %v260
  %v315 = vpack.c.b16 %v264, %v261
  %v316 = vpack.c.b16 %v265, %v262
  %v317 = vpack.c.b16 %v269, %v266
  %v318 = vpack.c.b16 %v270, %v267
  %v319 = vpack.c.b16 %v271, %v268
  %v320 = vpack.c.b16 %v272, %v272
  %v321 = vpack.c.b16 %v273, %v273
  %v322 = vpack.c.b16 %v274, %v274
  %v391 = vunpack.c.l.b16 %v77
  %v392 = vunpack.c.l.b16 %v78
  %v393 = vunpack.c.l.b16 %v79
  %v394 = vunpack.c.l.b16 %v80
  %v395 = vunpack.c.l.b16 %v81
  %v396 = vunpack.c.l.b16 %v82
  %v397 = vunpack.c.l.b16 %v83
  %v398 = vunpack.c.l.b16 %v84
  %v399 = vunpack.c.l.b16 %v85
  %v400 = vunpack.c.l.b16 %v86
  %v401 = vunpack.c.l.b16 %v87
  %v402 = vunpack.c.l.b16 %v88
  %v403 = vunpack.c.l.b16 %v89
  %v404 = vunpack.c.l.b16 %v90
  %v405 = vunpack.c.l.b16 %v91
  %v406 = vunpack.c.l.b16 %v92
  %v407 = vunpack.c.l.b16 %v93
  %v408 = vunpack.c.l.b16 %v94
  %v409 = vunpack.c.l.b16 %v95
  %v410 = vunpack.c.l.b16 %v96
  %v411 = vunpack.c.l.b16 %v97
  %v412 = vunpack.c.l.b16 %v98
  %v413 = vunpack.c.l.b16 %v99
  %v414 = vunpack.c.l.b16 %v100
  %v415 = vunpack.c.l.b16 %v101
  %v416 = vunpack.c.l.b16 %v102
  %v417 = vunpack.c.l.b16 %v103
  %v418 = vunpack.c.l.b16 %v104
  %v419 = vunpack.c.l.b16 %v105
  %v420 = vunpack.c.l.b16 %v106
  %v421 = vunpack.c.l.b16 %v107
  %v422 = vunpack.c.l.b16 %v108
  %v423 = vunpack.c.l.b16 %v109
  %v424 = vunpack.c.l.b16 %v110
  %v425 = vunpack.c.l.b16 %v111
  %v426 = vunpack.c.l.b16 %v112
  %v427 = vpack.c.b16 %v392, %v391
  %v428 = vpack.c.b16 %v394, %v393
  %v429 = vpack.c.b16 %v396, %v395
  %v430 = vpack.c.b16 %v398, %v397
  %v431 = vpack.c.b16 %v400, %v399
  %v432 = vpack.c.b16 %v402, %v401
  %v433 = vpack.c.b16 %v404, %v403
  %v434 = vpack.c.b16 %v406, %v405
  %v435 = vpack.c.b16 %v408, %v407
  %v436 = vpack.c.b16 %v410, %v409
  %v437 = vpack.c.b16 %v412, %v411
  %v438 = vpack.c.b16 %v414, %v413
  %v439 = vpack.c.b16 %v416, %v415
  %v440 = vpack.c.b16 %v418, %v417
  %v441 = vpack.c.b16 %v420, %v419
  %v442 = vpack.c.b16 %v422, %v421
  %v443 = vpack.c.b16 %v424, %v423
  %v444 = vpack.c.b16 %v426, %v425
  %vm463 = vcmask 261120
  %v465 = vsel %vm463, %v277, 0
  %v468 = vsel %vm463, %v280, 0
  %v471 = vsel %vm463, %v283, 0
  %v474 = vsel %vm463, %v286, 0
  %v477 = vsel %vm463, %v289, 0
  %v480 = vsel %vm463, %v292, 0
  %v483 = vsel %vm463, %v295, 0
  %v486 = vsel %vm463, %v298, 0
  %v489 = vsel %vm463, %v301, 0
  %v492 = vsel %vm463, %v304, 0
  %v495 = vsel %vm463, %v307, 0
  %v498 = vsel %vm463, %v310, 0
  %v501 = vsel %vm463, %v313, 0
  %v504 = vsel %vm463, %v316, 0
  %v507 = vsel %vm463, %v319, 0
  %v510 = vsel %vm463, %v322, 0
  %512 = vmatprep.subr.bf16.mxu0 0
  %513 = vmatpush1.bf16.msra.mxu0 %v427
  %514 = vmatprep.subr.bf16.mxu0 0
  %515 = vmatpush1.bf16.msra.mxu0 %v428
  %516 = vmatprep.subr.bf16.mxu0 0
  %517 = vmatpush1.bf16.msra.mxu0 %v429
  %518 = vmatprep.subr.bf16.mxu0 0
  %519 = vmatpush1.bf16.msra.mxu0 %v430
  %520 = vmatprep.subr.bf16.mxu0 0
  %521 = vmatpush1.bf16.msra.mxu0 %v431
  %522 = vmatprep.subr.bf16.mxu0 0
  %523 = vmatpush1.bf16.msra.mxu0 %v432
  %524 = vmatprep.subr.bf16.mxu0 0
  %525 = vmatpush1.bf16.msra.mxu0 %v433
  %526 = vmatprep.subr.bf16.mxu0 0
  %527 = vmatpush1.bf16.msra.mxu0 %v434
  %528 = vmatprep.subr.bf16.mxu0 0
  %529 = vmatpush1.bf16.msra.mxu0 %v435
  %530 = vmatprep.subr.bf16.mxu0 0
  %531 = vmatpush1.bf16.msra.mxu0 %v436
  %532 = vmatprep.subr.bf16.mxu0 0
  %533 = vmatpush1.bf16.msra.mxu0 %v437
  %534 = vmatprep.subr.bf16.mxu0 0
  %535 = vmatpush1.bf16.msra.mxu0 %v438
  %536 = vmatprep.subr.bf16.mxu0 0
  %537 = vmatpush1.bf16.msra.mxu0 %v439
  %538 = vmatprep.subr.bf16.mxu0 0
  %539 = vmatpush1.bf16.msra.mxu0 %v440
  %540 = vmatprep.subr.bf16.mxu0 0
  %541 = vmatpush1.bf16.msra.mxu0 %v441
  %542 = vmatprep.subr.bf16.mxu0 0
  %543 = vmatpush1.bf16.msra.mxu0 %v442
  %544 = vmatprep.mubr.bf16.mxu0 %v276
  %545 = vmatmul.mubr.bf16.gmra.mrb[0].mxu0 %v275
  %v546 = vpop.f32.mrb[0].mxu0
  %v547 = vadd.f32 %v118, %v546
  %v548 = vpop.f32.mrb[0].mxu0
  %v549 = vpop.f32.mrb[0].mxu0
  %v550 = vadd.f32 %v118, %v549
  %v551 = vpop.f32.mrb[0].mxu0
  %552 = vmatprep.mubr.bf16.mxu0 %v279
  %553 = vmatmul.mubr.bf16.gmra.mrb[0].mxu0 %v278
  %v554 = vpop.f32.mrb[0].mxu0
  %v555 = vadd.f32 %v118, %v554
  %v556 = vpop.f32.mrb[0].mxu0
  %v557 = vpop.f32.mrb[0].mxu0
  %v558 = vadd.f32 %v118, %v557
  %v559 = vpop.f32.mrb[0].mxu0
  %560 = vmatprep.mubr.bf16.mxu0 %v282
  %561 = vmatmul.mubr.bf16.gmra.mrb[0].mxu0 %v281
  %v562 = vpop.f32.mrb[0].mxu0
  %v563 = vadd.f32 %v118, %v562
  %v564 = vpop.f32.mrb[0].mxu0
  %v565 = vpop.f32.mrb[0].mxu0
  %v566 = vadd.f32 %v118, %v565
  %v567 = vpop.f32.mrb[0].mxu0
  %568 = vmatprep.mubr.bf16.mxu0 %v285
  %569 = vmatmul.mubr.bf16.gmra.mrb[0].mxu0 %v284
  %v570 = vpop.f32.mrb[0].mxu0
  %v571 = vadd.f32 %v118, %v570
  %v572 = vpop.f32.mrb[0].mxu0
  %v573 = vpop.f32.mrb[0].mxu0
  %v574 = vadd.f32 %v118, %v573
  %v575 = vpop.f32.mrb[0].mxu0
  %576 = vmatprep.mubr.bf16.mxu0 %v288
  %577 = vmatmul.mubr.bf16.gmra.mrb[0].mxu0 %v287
  %v578 = vpop.f32.mrb[0].mxu0
  %v579 = vadd.f32 %v118, %v578
  %v580 = vpop.f32.mrb[0].mxu0
  %v581 = vpop.f32.mrb[0].mxu0
  %v582 = vadd.f32 %v118, %v581
  %v583 = vpop.f32.mrb[0].mxu0
  %584 = vmatprep.mubr.bf16.mxu0 %v291
  %585 = vmatmul.mubr.bf16.gmra.mrb[0].mxu0 %v290
  %v586 = vpop.f32.mrb[0].mxu0
  %v587 = vadd.f32 %v118, %v586
  %v588 = vpop.f32.mrb[0].mxu0
  %v589 = vpop.f32.mrb[0].mxu0
  %v590 = vadd.f32 %v118, %v589
  %v591 = vpop.f32.mrb[0].mxu0
  %592 = vmatprep.mubr.bf16.mxu0 %v294
  %593 = vmatmul.mubr.bf16.gmra.mrb[0].mxu0 %v293
  %v594 = vpop.f32.mrb[0].mxu0
  %v595 = vadd.f32 %v118, %v594
  %v596 = vpop.f32.mrb[0].mxu0
  %v597 = vpop.f32.mrb[0].mxu0
  %v598 = vadd.f32 %v118, %v597
  %v599 = vpop.f32.mrb[0].mxu0
  %600 = vmatprep.mubr.bf16.mxu0 %v297
  %601 = vmatmul.mubr.bf16.gmra.mrb[0].mxu0 %v296
  %v602 = vpop.f32.mrb[0].mxu0
  %v603 = vadd.f32 %v118, %v602
  %v604 = vpop.f32.mrb[0].mxu0
  %v605 = vpop.f32.mrb[0].mxu0
  %v606 = vadd.f32 %v118, %v605
  %v607 = vpop.f32.mrb[0].mxu0
  %608 = vmatprep.mubr.bf16.mxu0 %v300
  %609 = vmatmul.mubr.bf16.gmra.mrb[0].mxu0 %v299
  %v610 = vpop.f32.mrb[0].mxu0
  %v611 = vadd.f32 %v118, %v610
  %v612 = vpop.f32.mrb[0].mxu0
  %v613 = vpop.f32.mrb[0].mxu0
  %v614 = vadd.f32 %v118, %v613
  %v615 = vpop.f32.mrb[0].mxu0
  %616 = vmatprep.mubr.bf16.mxu0 %v303
  %617 = vmatmul.mubr.bf16.gmra.mrb[0].mxu0 %v302
  %v618 = vpop.f32.mrb[0].mxu0
  %v619 = vadd.f32 %v118, %v618
  %v620 = vpop.f32.mrb[0].mxu0
  %v621 = vpop.f32.mrb[0].mxu0
  %v622 = vadd.f32 %v118, %v621
  %v623 = vpop.f32.mrb[0].mxu0
  %624 = vmatprep.mubr.bf16.mxu0 %v306
  %625 = vmatmul.mubr.bf16.gmra.mrb[0].mxu0 %v305
  %v626 = vpop.f32.mrb[0].mxu0
  %v627 = vadd.f32 %v118, %v626
  %v628 = vpop.f32.mrb[0].mxu0
  %v629 = vpop.f32.mrb[0].mxu0
  %v630 = vadd.f32 %v118, %v629
  %v631 = vpop.f32.mrb[0].mxu0
  %632 = vmatprep.mubr.bf16.mxu0 %v309
  %633 = vmatmul.mubr.bf16.gmra.mrb[0].mxu0 %v308
  %v634 = vpop.f32.mrb[0].mxu0
  %v635 = vadd.f32 %v118, %v634
  %v636 = vpop.f32.mrb[0].mxu0
  %v637 = vpop.f32.mrb[0].mxu0
  %v638 = vadd.f32 %v118, %v637
  %v639 = vpop.f32.mrb[0].mxu0
  %640 = vmatprep.mubr.bf16.mxu0 %v312
  %641 = vmatmul.mubr.bf16.gmra.mrb[0].mxu0 %v311
  %v642 = vpop.f32.mrb[0].mxu0
  %v643 = vadd.f32 %v118, %v642
  %v644 = vpop.f32.mrb[0].mxu0
  %v645 = vpop.f32.mrb[0].mxu0
  %v646 = vadd.f32 %v118, %v645
  %v647 = vpop.f32.mrb[0].mxu0
  %648 = vmatprep.mubr.bf16.mxu0 %v315
  %649 = vmatmul.mubr.bf16.gmra.mrb[0].mxu0 %v314
  %v650 = vpop.f32.mrb[0].mxu0
  %v651 = vadd.f32 %v118, %v650
  %v652 = vpop.f32.mrb[0].mxu0
  %v653 = vpop.f32.mrb[0].mxu0
  %v654 = vadd.f32 %v118, %v653
  %v655 = vpop.f32.mrb[0].mxu0
  %656 = vmatprep.mubr.bf16.mxu0 %v318
  %657 = vmatmul.mubr.bf16.gmra.mrb[0].mxu0 %v317
  %v658 = vpop.f32.mrb[0].mxu0
  %v659 = vadd.f32 %v118, %v658
  %v660 = vpop.f32.mrb[0].mxu0
  %v661 = vpop.f32.mrb[0].mxu0
  %v662 = vadd.f32 %v118, %v661
  %v663 = vpop.f32.mrb[0].mxu0
  %664 = vmatprep.mubr.bf16.mxu0 %v321
  %665 = vmatmul.mubr.bf16.gmra.mrb[0].mxu0 %v320
  %v666 = vpop.f32.mrb[0].mxu0
  %v667 = vadd.f32 %v118, %v666
  %v668 = vpop.f32.mrb[0].mxu0
  %v669 = vpop.f32.mrb[0].mxu0
  %v670 = vpop.f32.mrb[0].mxu0
  %671 = vdwg.mxu0
  %672 = vmatprep.subr.bf16.mxu0 0
  %673 = vmatpush1.bf16.msra.mxu0 %v443
  %674 = vmatprep.subr.bf16.mxu0 0
  %675 = vmatpush1.bf16.msra.mxu0 %v444
  %676 = vmatprep.subr.bf16.mxu0 0
  %677 = vmatpush1.bf16.msra.mxu0 0
  %678 = vmatprep.subr.bf16.mxu0 0
  %679 = vmatpush1.bf16.msra.mxu0 0
  %680 = vmatprep.subr.bf16.mxu0 0
  %681 = vmatpush1.bf16.msra.mxu0 0
  %682 = vmatprep.subr.bf16.mxu0 0
  %683 = vmatpush1.bf16.msra.mxu0 0
  %684 = vmatprep.subr.bf16.mxu0 0
  %685 = vmatpush1.bf16.msra.mxu0 0
  %686 = vmatprep.subr.bf16.mxu0 0
  %687 = vmatpush1.bf16.msra.mxu0 0
  %688 = vmatprep.subr.bf16.mxu0 0
  %689 = vmatpush1.bf16.msra.mxu0 0
  %690 = vmatprep.subr.bf16.mxu0 0
  %691 = vmatpush1.bf16.msra.mxu0 0
  %692 = vmatprep.subr.bf16.mxu0 0
  %693 = vmatpush1.bf16.msra.mxu0 0
  %694 = vmatprep.subr.bf16.mxu0 0
  %695 = vmatpush1.bf16.msra.mxu0 0
  %696 = vmatprep.subr.bf16.mxu0 0
  %697 = vmatpush1.bf16.msra.mxu0 0
  %698 = vmatprep.subr.bf16.mxu0 0
  %699 = vmatpush1.bf16.msra.mxu0 0
  %700 = vmatprep.subr.bf16.mxu0 0
  %701 = vmatpush1.bf16.msra.mxu0 0
  %702 = vmatprep.subr.bf16.mxu0 0
  %703 = vmatpush1.bf16.msra.mxu0 0
  %704 = vmatprep.mubr.bf16.mxu0 0
  %705 = vmatmul.mubr.bf16.gmra.mrb[0].mxu0 %v465
  %v706 = vpop.f32.mrb[0].mxu0
  %v707 = vadd.f32 %v547, %v706
  %v708 = vpop.f32.mrb[0].mxu0
  %v709 = vpop.f32.mrb[0].mxu0
  %v710 = vadd.f32 %v550, %v709
  %v711 = vpop.f32.mrb[0].mxu0
  %712 = vmatprep.mubr.bf16.mxu0 0
  %713 = vmatmul.mubr.bf16.gmra.mrb[0].mxu0 %v468
  %v714 = vpop.f32.mrb[0].mxu0
  %v715 = vadd.f32 %v555, %v714
  %v716 = vpop.f32.mrb[0].mxu0
  %v717 = vpop.f32.mrb[0].mxu0
  %v718 = vadd.f32 %v558, %v717
  %v719 = vpop.f32.mrb[0].mxu0
  %720 = vmatprep.mubr.bf16.mxu0 0
  %721 = vmatmul.mubr.bf16.gmra.mrb[0].mxu0 %v471
  %v722 = vpop.f32.mrb[0].mxu0
  %v723 = vadd.f32 %v563, %v722
  %v724 = vpop.f32.mrb[0].mxu0
  %v725 = vpop.f32.mrb[0].mxu0
  %v726 = vadd.f32 %v566, %v725
  %v727 = vpop.f32.mrb[0].mxu0
  %728 = vmatprep.mubr.bf16.mxu0 0
  %729 = vmatmul.mubr.bf16.gmra.mrb[0].mxu0 %v474
  %v730 = vpop.f32.mrb[0].mxu0
  %v731 = vadd.f32 %v571, %v730
  %v732 = vpop.f32.mrb[0].mxu0
  %v733 = vpop.f32.mrb[0].mxu0
  %v734 = vadd.f32 %v574, %v733
  %v735 = vpop.f32.mrb[0].mxu0
  %736 = vmatprep.mubr.bf16.mxu0 0
  %737 = vmatmul.mubr.bf16.gmra.mrb[0].mxu0 %v477
  %v738 = vpop.f32.mrb[0].mxu0
  %v739 = vadd.f32 %v579, %v738
  %v740 = vpop.f32.mrb[0].mxu0
  %v741 = vpop.f32.mrb[0].mxu0
  %v742 = vadd.f32 %v582, %v741
  %v743 = vpop.f32.mrb[0].mxu0
  %744 = vmatprep.mubr.bf16.mxu0 0
  %745 = vmatmul.mubr.bf16.gmra.mrb[0].mxu0 %v480
  %v746 = vpop.f32.mrb[0].mxu0
  %v747 = vadd.f32 %v587, %v746
  %v748 = vpop.f32.mrb[0].mxu0
  %v749 = vpop.f32.mrb[0].mxu0
  %v750 = vadd.f32 %v590, %v749
  %v751 = vpop.f32.mrb[0].mxu0
  %752 = vmatprep.mubr.bf16.mxu0 0
  %753 = vmatmul.mubr.bf16.gmra.mrb[0].mxu0 %v483
  %v754 = vpop.f32.mrb[0].mxu0
  %v755 = vadd.f32 %v595, %v754
  %v756 = vpop.f32.mrb[0].mxu0
  %v757 = vpop.f32.mrb[0].mxu0
  %v758 = vadd.f32 %v598, %v757
  %v759 = vpop.f32.mrb[0].mxu0
  %760 = vmatprep.mubr.bf16.mxu0 0
  %761 = vmatmul.mubr.bf16.gmra.mrb[0].mxu0 %v486
  %v762 = vpop.f32.mrb[0].mxu0
  %v763 = vadd.f32 %v603, %v762
  %v764 = vpop.f32.mrb[0].mxu0
  %v765 = vpop.f32.mrb[0].mxu0
  %v766 = vadd.f32 %v606, %v765
  %v767 = vpop.f32.mrb[0].mxu0
  %768 = vmatprep.mubr.bf16.mxu0 0
  %769 = vmatmul.mubr.bf16.gmra.mrb[0].mxu0 %v489
  %v770 = vpop.f32.mrb[0].mxu0
  %v771 = vadd.f32 %v611, %v770
  %v772 = vpop.f32.mrb[0].mxu0
  %v773 = vpop.f32.mrb[0].mxu0
  %v774 = vadd.f32 %v614, %v773
  %v775 = vpop.f32.mrb[0].mxu0
  %776 = vmatprep.mubr.bf16.mxu0 0
  %777 = vmatmul.mubr.bf16.gmra.mrb[0].mxu0 %v492
  %v778 = vpop.f32.mrb[0].mxu0
  %v779 = vadd.f32 %v619, %v778
  %v780 = vpop.f32.mrb[0].mxu0
  %v781 = vpop.f32.mrb[0].mxu0
  %v782 = vadd.f32 %v622, %v781
  %v783 = vpop.f32.mrb[0].mxu0
  %784 = vmatprep.mubr.bf16.mxu0 0
  %785 = vmatmul.mubr.bf16.gmra.mrb[0].mxu0 %v495
  %v786 = vpop.f32.mrb[0].mxu0
  %v787 = vadd.f32 %v627, %v786
  %v788 = vpop.f32.mrb[0].mxu0
  %v789 = vpop.f32.mrb[0].mxu0
  %v790 = vadd.f32 %v630, %v789
  %v791 = vpop.f32.mrb[0].mxu0
  %792 = vmatprep.mubr.bf16.mxu0 0
  %793 = vmatmul.mubr.bf16.gmra.mrb[0].mxu0 %v498
  %v794 = vpop.f32.mrb[0].mxu0
  %v795 = vadd.f32 %v635, %v794
  %v796 = vpop.f32.mrb[0].mxu0
  %v797 = vpop.f32.mrb[0].mxu0
  %v798 = vadd.f32 %v638, %v797
  %v799 = vpop.f32.mrb[0].mxu0
  %800 = vmatprep.mubr.bf16.mxu0 0
  %801 = vmatmul.mubr.bf16.gmra.mrb[0].mxu0 %v501
  %v802 = vpop.f32.mrb[0].mxu0
  %v803 = vadd.f32 %v643, %v802
  %v804 = vpop.f32.mrb[0].mxu0
  %v805 = vpop.f32.mrb[0].mxu0
  %v806 = vadd.f32 %v646, %v805
  %v807 = vpop.f32.mrb[0].mxu0
  %808 = vmatprep.mubr.bf16.mxu0 0
  %809 = vmatmul.mubr.bf16.gmra.mrb[0].mxu0 %v504
  %v810 = vpop.f32.mrb[0].mxu0
  %v811 = vadd.f32 %v651, %v810
  %v812 = vpop.f32.mrb[0].mxu0
  %v813 = vpop.f32.mrb[0].mxu0
  %v814 = vadd.f32 %v654, %v813
  %v815 = vpop.f32.mrb[0].mxu0
  %816 = vmatprep.mubr.bf16.mxu0 0
  %817 = vmatmul.mubr.bf16.gmra.mrb[0].mxu0 %v507
  %v818 = vpop.f32.mrb[0].mxu0
  %v819 = vadd.f32 %v659, %v818
  %v820 = vpop.f32.mrb[0].mxu0
  %v821 = vpop.f32.mrb[0].mxu0
  %v822 = vadd.f32 %v662, %v821
  %v823 = vpop.f32.mrb[0].mxu0
  %824 = vmatprep.mubr.bf16.mxu0 0
  %825 = vmatmul.mubr.bf16.gmra.mrb[0].mxu0 %v510
  %v826 = vpop.f32.mrb[0].mxu0
  %v827 = vadd.f32 %v667, %v826
  %v828 = vpop.f32.mrb[0].mxu0
  %v829 = vpop.f32.mrb[0].mxu0
  %v830 = vpop.f32.mrb[0].mxu0
  %831 = vdwg.mxu0
  %v832 = vmax.f32 %v707, 0.0
  %v833 = vmax.f32 %v710, 0.0
  %v834 = vmax.f32 %v715, 0.0
  %v835 = vmax.f32 %v718, 0.0
  %v836 = vmax.f32 %v723, 0.0
  %v837 = vmax.f32 %v726, 0.0
  %v838 = vmax.f32 %v731, 0.0
  %v839 = vmax.f32 %v734, 0.0
  %v840 = vmax.f32 %v739, 0.0
  %v841 = vmax.f32 %v742, 0.0
  %v842 = vmax.f32 %v747, 0.0
  %v843 = vmax.f32 %v750, 0.0
  %v844 = vmax.f32 %v755, 0.0
  %v845 = vmax.f32 %v758, 0.0
  %v846 = vmax.f32 %v763, 0.0
  %v847 = vmax.f32 %v766, 0.0
  %v848 = vmax.f32 %v771, 0.0
  %v849 = vmax.f32 %v774, 0.0
  %v850 = vmax.f32 %v779, 0.0
  %v851 = vmax.f32 %v782, 0.0
  %v852 = vmax.f32 %v787, 0.0
  %v853 = vmax.f32 %v790, 0.0
  %v854 = vmax.f32 %v795, 0.0
  %v855 = vmax.f32 %v798, 0.0
  %v856 = vmax.f32 %v803, 0.0
  %v857 = vmax.f32 %v806, 0.0
  %v858 = vmax.f32 %v811, 0.0
  %v859 = vmax.f32 %v814, 0.0
  %v860 = vmax.f32 %v819, 0.0
  %v861 = vmax.f32 %v822, 0.0
  %v862 = vmax.f32 %v827, 0.0
  %vm863 = vcmask 523264
  %864 = vst.msk [vmem:[%s3] sm:$0xff] %vm863, %v832
  %865 = vst.msk [vmem:[%s3 + $0x8] sm:$0xff] %vm863, %v833
  %866 = vst.msk [vmem:[%s3 + $0x10] sm:$0xff] %vm863, %v834
  %867 = vst.msk [vmem:[%s3 + $0x18] sm:$0xff] %vm863, %v835
  %868 = vst.msk [vmem:[%s3 + $0x20] sm:$0xff] %vm863, %v836
  %869 = vst.msk [vmem:[%s3 + $0x28] sm:$0xff] %vm863, %v837
  %870 = vst.msk [vmem:[%s3 + $0x30] sm:$0xff] %vm863, %v838
  %871 = vst.msk [vmem:[%s3 + $0x38] sm:$0xff] %vm863, %v839
  %872 = vst.msk [vmem:[%s3 + $0x40] sm:$0xff] %vm863, %v840
  %873 = vst.msk [vmem:[%s3 + $0x48] sm:$0xff] %vm863, %v841
  %874 = vst.msk [vmem:[%s3 + $0x50] sm:$0xff] %vm863, %v842
  %875 = vst.msk [vmem:[%s3 + $0x58] sm:$0xff] %vm863, %v843
  %876 = vst.msk [vmem:[%s3 + $0x60] sm:$0xff] %vm863, %v844
  %877 = vst.msk [vmem:[%s3 + $0x68] sm:$0xff] %vm863, %v845
  %878 = vst.msk [vmem:[%s3 + $0x70] sm:$0xff] %vm863, %v846
  %879 = vst.msk [vmem:[%s3 + $0x78] sm:$0xff] %vm863, %v847
  %880 = vst.msk [vmem:[%s3 + $0x80] sm:$0xff] %vm863, %v848
  %881 = vst.msk [vmem:[%s3 + $0x88] sm:$0xff] %vm863, %v849
  %882 = vst.msk [vmem:[%s3 + $0x90] sm:$0xff] %vm863, %v850
  %883 = vst.msk [vmem:[%s3 + $0x98] sm:$0xff] %vm863, %v851
  %884 = vst.msk [vmem:[%s3 + $0xa0] sm:$0xff] %vm863, %v852
  %885 = vst.msk [vmem:[%s3 + $0xa8] sm:$0xff] %vm863, %v853
  %886 = vst.msk [vmem:[%s3 + $0xb0] sm:$0xff] %vm863, %v854
  %887 = vst.msk [vmem:[%s3 + $0xb8] sm:$0xff] %vm863, %v855
  %888 = vst.msk [vmem:[%s3 + $0xc0] sm:$0xff] %vm863, %v856
  %889 = vst.msk [vmem:[%s3 + $0xc8] sm:$0xff] %vm863, %v857
  %890 = vst.msk [vmem:[%s3 + $0xd0] sm:$0xff] %vm863, %v858
  %891 = vst.msk [vmem:[%s3 + $0xd8] sm:$0xff] %vm863, %v859
  %892 = vst.msk [vmem:[%s3 + $0xe0] sm:$0xff] %vm863, %v860
  %893 = vst.msk [vmem:[%s3 + $0xe8] sm:$0xff] %vm863, %v861
  %vm894 = vcmask 517120
  %895 = vst.msk [vmem:[%s3 + $0xf0] sm:$0x3] %vm894, %v862
  // Predicated region
  $region14: #{forward.4} parent=0 // pred_check
    _
  $region15: #{forward.4} parent=0 // pred_check_branch
    %897 = sbr.rel (0) target = $region17
  $region16: #{forward.4} parent=0 // pred_region
    _
  $region17: #{forward.4} parent=0 // pred_fallthru
    _
  // Predicated region
  $region18: #{forward.4} parent=0 // pred_check
    _
  $region19: #{forward.4} parent=0 // pred_check_branch
    %899 = sbr.rel (0) target = $region21
  $region20: #{forward.4} parent=0 // pred_region
    _
  $region21: #{forward.4} parent=0 // pred_fallthru
    _

// kernel: forward.5
$region0: #{forward.5}
  #allocation0 [shape = 'u32[]', space=smem, size = 0x4, offset = 0x4, fixed_abs, tag = 'smem constant byte address 0x4 - core index']
  #allocation1 [shape = 'u32[144,128]{1,0:T(1,128)}', space=vmem, size = 0x12000, scoped, tag = 'internal scratch']
  %s0 = inlined_call_operand.vmem [shape: bf16[2,1600], index: 0, kind: input, shape index: {}]
  %s1 = inlined_call_operand.vmem [shape: bf16[1600,128], index: 1, kind: input, shape index: {}]
  %s2 = inlined_call_operand.vmem [shape: f32[1,128], index: 2, kind: input, shape index: {}]
  %s3 = inlined_call_operand.vmem [shape: bf16[128,128], index: 3, kind: input, shape index: {}]
  %s4 = inlined_call_operand.vmem [shape: f32[1,128], index: 4, kind: input, shape index: {}]
  %s5 = inlined_call_operand.hbm [shape: f32[2,128], index: 5, kind: output, shape index: {}]
  %s6 = sld [smem:[#allocation0]]
  $region30: #{forward.5} parent=0
    _
  %s8 = ssub.s32 1, %s6
  %s9 = scalar_select 0, %s8, %s6
  $region1: #{forward.5} parent=0
    #allocation2 [shape = 'u8[1024]{0}', space=vmem, size = 0x400, scoped, tag = 'output window, operand 0, single buffered']
    #allocation3 [shape = 's32[1]{0}', space=sflag, size = 0x4, scoped, tag = 'scoped memory for forward.5']
    %10 = vsyncpa [#allocation3], 0
    // Predicated region
    $region2: #{forward.5} parent=1 // pred_check
      _
    $region3: #{forward.5} parent=1 // pred_check_branch
      %12 = sbr.rel (0) target = $region5
    $region4: #{forward.5} parent=1 // pred_region
      _
    $region5: #{forward.5} parent=1 // pred_fallthru
      _
    // Predicated region
    $region6: #{forward.5} parent=1 // pred_check
      _
    $region7: #{forward.5} parent=1 // pred_check_branch
      %14 = sbr.rel (0) target = $region9
    $region8: #{forward.5} parent=1 // pred_region
      _
    $region9: #{forward.5} parent=1 // pred_fallthru
      _
    // Predicated region
    $region10: #{forward.5} parent=1 // pred_check
      _
    $region11: #{forward.5} parent=1 // pred_check_branch
      %16 = sbr.rel (0) target = $region13
    $region12: #{forward.5} parent=1 // pred_region
      _
    $region13: #{forward.5} parent=1 // pred_fallthru
      _
    // Predicated region
    $region14: #{forward.5} parent=1 // pred_check
      _
    $region15: #{forward.5} parent=1 // pred_check_branch
      %18 = sbr.rel (0) target = $region17
    $region16: #{forward.5} parent=1 // pred_region
      _
    $region17: #{forward.5} parent=1 // pred_fallthru
      _
    // Predicated region
    $region18: #{forward.5} parent=1 // pred_check
      _
    $region19: #{forward.5} parent=1 // pred_check_branch
      %20 = sbr.rel (0) target = $region21
    $region20: #{forward.5} parent=1 // pred_region
      _
    $region21: #{forward.5} parent=1 // pred_fallthru
      _
    %v22 = vld [vmem:[%s0] sm:$0xff]
    %v23 = vld [vmem:[%s0 + $0x8] sm:$0x1f]
    %v24 = vld [vmem:[%s1] sm:$0xf]
    %v25 = vld [vmem:[%s1 + $0x4] sm:$0xf]
    %v26 = vld [vmem:[%s1 + $0x8] sm:$0xf]
    %v27 = vld [vmem:[%s1 + $0xc] sm:$0xf]
    %v28 = vld [vmem:[%s1 + $0x10] sm:$0xf]
    %v29 = vld [vmem:[%s1 + $0x14] sm:$0xf]
    %v30 = vld [vmem:[%s1 + $0x18] sm:$0xf]
    %v31 = vld [vmem:[%s1 + $0x1c] sm:$0xf]
    %v32 = vld [vmem:[%s1 + $0x20] sm:$0xf]
    %v33 = vld [vmem:[%s1 + $0x24] sm:$0xf]
    %v34 = vld [vmem:[%s1 + $0x28] sm:$0xf]
    %v35 = vld [vmem:[%s1 + $0x2c] sm:$0xf]
    %v36 = vld [vmem:[%s1 + $0x30] sm:$0xf]
    %v37 = vld [vmem:[%s1 + $0x34] sm:$0xf]
    %v38 = vld [vmem:[%s1 + $0x38] sm:$0xf]
    %v39 = vld [vmem:[%s1 + $0x3c] sm:$0xf]
    %v40 = vld [vmem:[%s1 + $0x40] sm:$0xf]
    %v41 = vld [vmem:[%s1 + $0x44] sm:$0xf]
    %v42 = vld [vmem:[%s1 + $0x48] sm:$0xf]
    %v43 = vld [vmem:[%s1 + $0x4c] sm:$0xf]
    %v44 = vld [vmem:[%s1 + $0x50] sm:$0xf]
    %v45 = vld [vmem:[%s1 + $0x54] sm:$0xf]
    %v46 = vld [vmem:[%s1 + $0x58] sm:$0xf]
    %v47 = vld [vmem:[%s1 + $0x5c] sm:$0xf]
    %v48 = vld [vmem:[%s1 + $0x60] sm:$0xf]
    %v49 = vld [vmem:[%s1 + $0x64] sm:$0xf]
    %v50 = vld [vmem:[%s1 + $0x68] sm:$0xf]
    %v51 = vld [vmem:[%s1 + $0x6c] sm:$0xf]
    %v52 = vld [vmem:[%s1 + $0x70] sm:$0xf]
    %v53 = vld [vmem:[%s1 + $0x74] sm:$0xf]
    %v54 = vld [vmem:[%s1 + $0x78] sm:$0xf]
    %v55 = vld [vmem:[%s1 + $0x7c] sm:$0xf]
    %v56 = vld [vmem:[%s1 + $0x80] sm:$0xf]
    %v57 = vld [vmem:[%s1 + $0x84] sm:$0xf]
    %v58 = vld [vmem:[%s1 + $0x88] sm:$0xf]
    %v59 = vld [vmem:[%s1 + $0x8c] sm:$0xf]
    %v60 = vld [vmem:[%s1 + $0x90] sm:$0xf]
    %v61 = vld [vmem:[%s1 + $0x94] sm:$0xf]
    %v62 = vld [vmem:[%s1 + $0x98] sm:$0xf]
    %v63 = vld [vmem:[%s1 + $0x9c] sm:$0xf]
    %v64 = vld [vmem:[%s1 + $0xa0] sm:$0xf]
    %v65 = vld [vmem:[%s1 + $0xa4] sm:$0xf]
    %v66 = vld [vmem:[%s1 + $0xa8] sm:$0xf]
    %v67 = vld [vmem:[%s1 + $0xac] sm:$0xf]
    %v68 = vld [vmem:[%s1 + $0xb0] sm:$0xf]
    %v69 = vld [vmem:[%s1 + $0xb4] sm:$0xf]
    %v70 = vld [vmem:[%s1 + $0xb8] sm:$0xf]
    %v71 = vld [vmem:[%s1 + $0xbc] sm:$0xf]
    %v72 = vld [vmem:[%s1 + $0xc0] sm:$0xf]
    %v73 = vld [vmem:[%s1 + $0xc4] sm:$0xf]
    %v74 = vld [vmem:[%s1 + $0xc8] sm:$0xf]
    %v75 = vld [vmem:[%s1 + $0xcc] sm:$0xf]
    %v76 = vld [vmem:[%s1 + $0xd0] sm:$0xf]
    %v77 = vld [vmem:[%s1 + $0xd4] sm:$0xf]
    %v78 = vld [vmem:[%s1 + $0xd8] sm:$0xf]
    %v79 = vld [vmem:[%s1 + $0xdc] sm:$0xf]
    %v80 = vld [vmem:[%s1 + $0xe0] sm:$0xf]
    %v81 = vld [vmem:[%s1 + $0xe4] sm:$0xf]
    %v82 = vld [vmem:[%s1 + $0xe8] sm:$0xf]
    %v83 = vld [vmem:[%s1 + $0xec] sm:$0xf]
    %v84 = vld [vmem:[%s1 + $0xf0] sm:$0xf]
    %v85 = vld [vmem:[%s1 + $0xf4] sm:$0xf]
    %v86 = vld [vmem:[%s1 + $0xf8] sm:$0xf]
    %v87 = vld [vmem:[%s1 + $0xfc] sm:$0xf]
    %v88 = vld [vmem:[%s1 + $0x100] sm:$0xf]
    %v89 = vld [vmem:[%s1 + $0x104] sm:$0xf]
    %v90 = vld [vmem:[%s1 + $0x108] sm:$0xf]
    %v91 = vld [vmem:[%s1 + $0x10c] sm:$0xf]
    %v92 = vld [vmem:[%s1 + $0x110] sm:$0xf]
    %v93 = vld [vmem:[%s1 + $0x114] sm:$0xf]
    %v94 = vld [vmem:[%s1 + $0x118] sm:$0xf]
    %v95 = vld [vmem:[%s1 + $0x11c] sm:$0xf]
    %v96 = vld [vmem:[%s1 + $0x120] sm:$0xf]
    %v97 = vld [vmem:[%s1 + $0x124] sm:$0xf]
    %v98 = vld [vmem:[%s1 + $0x128] sm:$0xf]
    %v99 = vld [vmem:[%s1 + $0x12c] sm:$0xf]
    %v100 = vld [vmem:[%s1 + $0x130] sm:$0xf]
    %v101 = vld [vmem:[%s1 + $0x134] sm:$0xf]
    %v102 = vld [vmem:[%s1 + $0x138] sm:$0xf]
    %v103 = vld [vmem:[%s1 + $0x13c] sm:$0xf]
    %v104 = vld [vmem:[%s1 + $0x140] sm:$0xf]
    %v105 = vld [vmem:[%s1 + $0x144] sm:$0xf]
    %v106 = vld [vmem:[%s1 + $0x148] sm:$0xf]
    %v107 = vld [vmem:[%s1 + $0x14c] sm:$0xf]
    %v108 = vld [vmem:[%s1 + $0x150] sm:$0xf]
    %v109 = vld [vmem:[%s1 + $0x154] sm:$0xf]
    %v110 = vld [vmem:[%s1 + $0x158] sm:$0xf]
    %v111 = vld [vmem:[%s1 + $0x15c] sm:$0xf]
    %v112 = vld [vmem:[%s1 + $0x160] sm:$0xf]
    %v113 = vld [vmem:[%s1 + $0x164] sm:$0xf]
    %v114 = vld [vmem:[%s1 + $0x168] sm:$0xf]
    %v115 = vld [vmem:[%s1 + $0x16c] sm:$0xf]
    %v116 = vld [vmem:[%s1 + $0x170] sm:$0xf]
    %v117 = vld [vmem:[%s1 + $0x174] sm:$0xf]
    %v118 = vld [vmem:[%s1 + $0x178] sm:$0xf]
    %v119 = vld [vmem:[%s1 + $0x17c] sm:$0xf]
    %v120 = vld [vmem:[%s1 + $0x180] sm:$0xf]
    %v121 = vld [vmem:[%s1 + $0x184] sm:$0xf]
    %v122 = vld [vmem:[%s1 + $0x188] sm:$0xf]
    %v123 = vld [vmem:[%s1 + $0x18c] sm:$0xf]
    %v124 = vld [vmem:[%s1 + $0x190] sm:$0xf]
    %v125 = vld [vmem:[%s1 + $0x194] sm:$0xf]
    %v126 = vld [vmem:[%s1 + $0x198] sm:$0xf]
    %v127 = vld [vmem:[%s1 + $0x19c] sm:$0xf]
    %v128 = vld [vmem:[%s1 + $0x1a0] sm:$0xf]
    %v129 = vld [vmem:[%s1 + $0x1a4] sm:$0xf]
    %v130 = vld [vmem:[%s1 + $0x1a8] sm:$0xf]
    %v131 = vld [vmem:[%s1 + $0x1ac] sm:$0xf]
    %v132 = vld [vmem:[%s1 + $0x1b0] sm:$0xf]
    %v133 = vld [vmem:[%s1 + $0x1b4] sm:$0xf]
    %v134 = vld [vmem:[%s1 + $0x1b8] sm:$0xf]
    %v135 = vld [vmem:[%s1 + $0x1bc] sm:$0xf]
    %v136 = vld [vmem:[%s1 + $0x1c0] sm:$0xf]
    %v137 = vld [vmem:[%s1 + $0x1c4] sm:$0xf]
    %v138 = vld [vmem:[%s1 + $0x1c8] sm:$0xf]
    %v139 = vld [vmem:[%s1 + $0x1cc] sm:$0xf]
    %v140 = vld [vmem:[%s1 + $0x1d0] sm:$0xf]
    %v141 = vld [vmem:[%s1 + $0x1d4] sm:$0xf]
    %v142 = vld [vmem:[%s1 + $0x1d8] sm:$0xf]
    %v143 = vld [vmem:[%s1 + $0x1dc] sm:$0xf]
    %v144 = vld [vmem:[%s1 + $0x1e0] sm:$0xf]
    %v145 = vld [vmem:[%s1 + $0x1e4] sm:$0xf]
    %v146 = vld [vmem:[%s1 + $0x1e8] sm:$0xf]
    %v147 = vld [vmem:[%s1 + $0x1ec] sm:$0xf]
    %v148 = vld [vmem:[%s1 + $0x1f0] sm:$0xf]
    %v149 = vld [vmem:[%s1 + $0x1f4] sm:$0xf]
    %v150 = vld [vmem:[%s1 + $0x1f8] sm:$0xf]
    %v151 = vld [vmem:[%s1 + $0x1fc] sm:$0xf]
    %v152 = vld [vmem:[%s1 + $0x200] sm:$0xf]
    %v153 = vld [vmem:[%s1 + $0x204] sm:$0xf]
    %v154 = vld [vmem:[%s1 + $0x208] sm:$0xf]
    %v155 = vld [vmem:[%s1 + $0x20c] sm:$0xf]
    %v156 = vld [vmem:[%s1 + $0x210] sm:$0xf]
    %v157 = vld [vmem:[%s1 + $0x214] sm:$0xf]
    %v158 = vld [vmem:[%s1 + $0x218] sm:$0xf]
    %v159 = vld [vmem:[%s1 + $0x21c] sm:$0xf]
    %v160 = vld [vmem:[%s1 + $0x220] sm:$0xf]
    %v161 = vld [vmem:[%s1 + $0x224] sm:$0xf]
    %v162 = vld [vmem:[%s1 + $0x228] sm:$0xf]
    %v163 = vld [vmem:[%s1 + $0x22c] sm:$0xf]
    %v164 = vld [vmem:[%s1 + $0x230] sm:$0xf]
    %v165 = vld [vmem:[%s1 + $0x234] sm:$0xf]
    %v166 = vld [vmem:[%s1 + $0x238] sm:$0xf]
    %v167 = vld [vmem:[%s1 + $0x23c] sm:$0xf]
    %v168 = vld [vmem:[%s1 + $0x240] sm:$0xf]
    %v169 = vld [vmem:[%s1 + $0x244] sm:$0xf]
    %v170 = vld [vmem:[%s1 + $0x248] sm:$0xf]
    %v171 = vld [vmem:[%s1 + $0x24c] sm:$0xf]
    %v172 = vld [vmem:[%s1 + $0x250] sm:$0xf]
    %v173 = vld [vmem:[%s1 + $0x254] sm:$0xf]
    %v174 = vld [vmem:[%s1 + $0x258] sm:$0xf]
    %v175 = vld [vmem:[%s1 + $0x25c] sm:$0xf]
    %v176 = vld [vmem:[%s1 + $0x260] sm:$0xf]
    %v177 = vld [vmem:[%s1 + $0x264] sm:$0xf]
    %v178 = vld [vmem:[%s1 + $0x268] sm:$0xf]
    %v179 = vld [vmem:[%s1 + $0x26c] sm:$0xf]
    %v180 = vld [vmem:[%s1 + $0x270] sm:$0xf]
    %v181 = vld [vmem:[%s1 + $0x274] sm:$0xf]
    %v182 = vld [vmem:[%s1 + $0x278] sm:$0xf]
    %v183 = vld [vmem:[%s1 + $0x27c] sm:$0xf]
    %v184 = vld [vmem:[%s1 + $0x280] sm:$0xf]
    %v185 = vld [vmem:[%s1 + $0x284] sm:$0xf]
    %v186 = vld [vmem:[%s1 + $0x288] sm:$0xf]
    %v187 = vld [vmem:[%s1 + $0x28c] sm:$0xf]
    %v188 = vld [vmem:[%s1 + $0x290] sm:$0xf]
    %v189 = vld [vmem:[%s1 + $0x294] sm:$0xf]
    %v190 = vld [vmem:[%s1 + $0x298] sm:$0xf]
    %v191 = vld [vmem:[%s1 + $0x29c] sm:$0xf]
    %v192 = vld [vmem:[%s1 + $0x2a0] sm:$0xf]
    %v193 = vld [vmem:[%s1 + $0x2a4] sm:$0xf]
    %v194 = vld [vmem:[%s1 + $0x2a8] sm:$0xf]
    %v195 = vld [vmem:[%s1 + $0x2ac] sm:$0xf]
    %v196 = vld [vmem:[%s1 + $0x2b0] sm:$0xf]
    %v197 = vld [vmem:[%s1 + $0x2b4] sm:$0xf]
    %v198 = vld [vmem:[%s1 + $0x2b8] sm:$0xf]
    %v199 = vld [vmem:[%s1 + $0x2bc] sm:$0xf]
    %v200 = vld [vmem:[%s1 + $0x2c0] sm:$0xf]
    %v201 = vld [vmem:[%s1 + $0x2c4] sm:$0xf]
    %v202 = vld [vmem:[%s1 + $0x2c8] sm:$0xf]
    %v203 = vld [vmem:[%s1 + $0x2cc] sm:$0xf]
    %v204 = vld [vmem:[%s1 + $0x2d0] sm:$0xf]
    %v205 = vld [vmem:[%s1 + $0x2d4] sm:$0xf]
    %v206 = vld [vmem:[%s1 + $0x2d8] sm:$0xf]
    %v207 = vld [vmem:[%s1 + $0x2dc] sm:$0xf]
    %v208 = vld [vmem:[%s1 + $0x2e0] sm:$0xf]
    %v209 = vld [vmem:[%s1 + $0x2e4] sm:$0xf]
    %v210 = vld [vmem:[%s1 + $0x2e8] sm:$0xf]
    %v211 = vld [vmem:[%s1 + $0x2ec] sm:$0xf]
    %v212 = vld [vmem:[%s1 + $0x2f0] sm:$0xf]
    %v213 = vld [vmem:[%s1 + $0x2f4] sm:$0xf]
    %v214 = vld [vmem:[%s1 + $0x2f8] sm:$0xf]
    %v215 = vld [vmem:[%s1 + $0x2fc] sm:$0xf]
    %v216 = vld [vmem:[%s1 + $0x300] sm:$0xf]
    %v217 = vld [vmem:[%s1 + $0x304] sm:$0xf]
    %v218 = vld [vmem:[%s1 + $0x308] sm:$0xf]
    %v219 = vld [vmem:[%s1 + $0x30c] sm:$0xf]
    %v220 = vld [vmem:[%s1 + $0x310] sm:$0xf]
    %v221 = vld [vmem:[%s1 + $0x314] sm:$0xf]
    %v222 = vld [vmem:[%s1 + $0x318] sm:$0xf]
    %v223 = vld [vmem:[%s1 + $0x31c] sm:$0xf]
    %v224 = vld [vmem:[%s2] sm:$0x1]
    %v226 = vlaneseq
    %v227 = vshrl.u32 %v226, 7
    %v228 = vsub.s32 0, %v227
    %v229 = vrot.slane %v224, %v228
    %v233 = vcombine.high %v22, %v22
    %v235 = vunpack.c.l.s4 1966171168
    %v236 = vunpack.c.0.s8 %v235
    %v237 = vlaneseq
    %v238 = vshrl.u32 %v237, 7
    %v239 = vsub.s32 %v236, %v238
    %v240 = vrot.slane %v22, %v239
    %v242 = vunpack.c.l.s4 1966171168
    %v243 = vunpack.c.0.s8 %v242
    %v244 = vlaneseq
    %v245 = vshrl.u32 %v244, 7
    %v246 = vsub.s32 %v243, %v245
    %v247 = vrot.slane %v233, %v246
    %v248 = vcombine.high %v240, %v240
    %v249 = vcombine.high %v247, %v247
    %v251 = vunpack.c.l.s4 1966171168
    %v252 = vunpack.c.0.s8 %v251
    %v253 = vlaneseq
    %v254 = vshrl.u32 %v253, 7
    %v255 = vsub.s32 %v252, %v254
    %v256 = vrot.slane %v240, %v255
    %v258 = vunpack.c.l.s4 1966171168
    %v259 = vunpack.c.0.s8 %v258
    %v260 = vlaneseq
    %v261 = vshrl.u32 %v260, 7
    %v262 = vsub.s32 %v259, %v261
    %v263 = vrot.slane %v247, %v262
    %v265 = vunpack.c.l.s4 1966171168
    %v266 = vunpack.c.0.s8 %v265
    %v267 = vlaneseq
    %v268 = vshrl.u32 %v267, 7
    %v269 = vsub.s32 %v266, %v268
    %v270 = vrot.slane %v248, %v269
    %v272 = vunpack.c.l.s4 1966171168
    %v273 = vunpack.c.0.s8 %v272
    %v274 = vlaneseq
    %v275 = vshrl.u32 %v274, 7
    %v276 = vsub.s32 %v273, %v275
    %v277 = vrot.slane %v249, %v276
    %v278 = vcombine.high %v256, %v256
    %v279 = vcombine.high %v263, %v263
    %v280 = vcombine.high %v270, %v270
    %v281 = vcombine.high %v277, %v277
    %v282 = vcombine.high %v23, %v23
    %v284 = vunpack.c.l.s4 1966171168
    %v285 = vunpack.c.0.s8 %v284
    %v286 = vlaneseq
    %v287 = vshrl.u32 %v286, 7
    %v288 = vsub.s32 %v285, %v287
    %v289 = vrot.slane %v23, %v288
    %v291 = vunpack.c.l.s4 1966171168
    %v292 = vunpack.c.0.s8 %v291
    %v293 = vlaneseq
    %v294 = vshrl.u32 %v293, 7
    %v295 = vsub.s32 %v292, %v294
    %v296 = vrot.slane %v282, %v295
    %v297 = vcombine.high %v289, %v289
    %v299 = vunpack.c.l.s4 1966171168
    %v300 = vunpack.c.0.s8 %v299
    %v301 = vlaneseq
    %v302 = vshrl.u32 %v301, 7
    %v303 = vsub.s32 %v300, %v302
    %v304 = vrot.slane %v289, %v303
    %v306 = vunpack.c.l.s4 1966171168
    %v307 = vunpack.c.0.s8 %v306
    %v308 = vlaneseq
    %v309 = vshrl.u32 %v308, 7
    %v310 = vsub.s32 %v307, %v309
    %v311 = vrot.slane %v296, %v310
    %v313 = vunpack.c.l.s4 1966171168
    %v314 = vunpack.c.0.s8 %v313
    %v315 = vlaneseq
    %v316 = vshrl.u32 %v315, 7
    %v317 = vsub.s32 %v314, %v316
    %v318 = vrot.slane %v297, %v317
    %v319 = vcombine.high %v304, %v304
    %v320 = vcombine.high %v318, %v318
    %v533 = vunpack.c.l.b16 %v24
    %v534 = vunpack.c.l.b16 %v25
    %v535 = vunpack.c.l.b16 %v26
    %v536 = vunpack.c.l.b16 %v27
    %v537 = vunpack.c.l.b16 %v28
    %v538 = vunpack.c.l.b16 %v29
    %v539 = vunpack.c.l.b16 %v30
    %v540 = vunpack.c.l.b16 %v31
    %v541 = vunpack.c.l.b16 %v32
    %v542 = vunpack.c.l.b16 %v33
    %v543 = vunpack.c.l.b16 %v34
    %v544 = vunpack.c.l.b16 %v35
    %v545 = vunpack.c.l.b16 %v36
    %v546 = vunpack.c.l.b16 %v37
    %v547 = vunpack.c.l.b16 %v38
    %v548 = vunpack.c.l.b16 %v39
    %v549 = vunpack.c.l.b16 %v40
    %v550 = vunpack.c.l.b16 %v41
    %v551 = vunpack.c.l.b16 %v42
    %v552 = vunpack.c.l.b16 %v43
    %v553 = vunpack.c.l.b16 %v44
    %v554 = vunpack.c.l.b16 %v45
    %v555 = vunpack.c.l.b16 %v46
    %v556 = vunpack.c.l.b16 %v47
    %v557 = vunpack.c.l.b16 %v48
    %v558 = vunpack.c.l.b16 %v49
    %v559 = vunpack.c.l.b16 %v50
    %v560 = vunpack.c.l.b16 %v51
    %v561 = vunpack.c.l.b16 %v52
    %v562 = vunpack.c.l.b16 %v53
    %v563 = vunpack.c.l.b16 %v54
    %v564 = vunpack.c.l.b16 %v55
    %v565 = vunpack.c.l.b16 %v56
    %v566 = vunpack.c.l.b16 %v57
    %v567 = vunpack.c.l.b16 %v58
    %v568 = vunpack.c.l.b16 %v59
    %v569 = vunpack.c.l.b16 %v60
    %v570 = vunpack.c.l.b16 %v61
    %v571 = vunpack.c.l.b16 %v62
    %v572 = vunpack.c.l.b16 %v63
    %v573 = vunpack.c.l.b16 %v64
    %v574 = vunpack.c.l.b16 %v65
    %v575 = vunpack.c.l.b16 %v66
    %v576 = vunpack.c.l.b16 %v67
    %v577 = vunpack.c.l.b16 %v68
    %v578 = vunpack.c.l.b16 %v69
    %v579 = vunpack.c.l.b16 %v70
    %v580 = vunpack.c.l.b16 %v71
    %v581 = vunpack.c.l.b16 %v72
    %v582 = vunpack.c.l.b16 %v73
    %v583 = vunpack.c.l.b16 %v74
    %v584 = vunpack.c.l.b16 %v75
    %v585 = vunpack.c.l.b16 %v76
    %v586 = vunpack.c.l.b16 %v77
    %v587 = vunpack.c.l.b16 %v78
    %v588 = vunpack.c.l.b16 %v79
    %v589 = vunpack.c.l.b16 %v80
    %v590 = vunpack.c.l.b16 %v81
    %v591 = vunpack.c.l.b16 %v82
    %v592 = vunpack.c.l.b16 %v83
    %v593 = vunpack.c.l.b16 %v84
    %v594 = vunpack.c.l.b16 %v85
    %v595 = vunpack.c.l.b16 %v86
    %v596 = vunpack.c.l.b16 %v87
    %v597 = vunpack.c.l.b16 %v88
    %v598 = vunpack.c.l.b16 %v89
    %v599 = vunpack.c.l.b16 %v90
    %v600 = vunpack.c.l.b16 %v91
    %v601 = vunpack.c.l.b16 %v92
    %v602 = vunpack.c.l.b16 %v93
    %v603 = vunpack.c.l.b16 %v94
    %v604 = vunpack.c.l.b16 %v95
    %v605 = vunpack.c.l.b16 %v96
    %v606 = vunpack.c.l.b16 %v97
    %v607 = vunpack.c.l.b16 %v98
    %v608 = vunpack.c.l.b16 %v99
    %v609 = vunpack.c.l.b16 %v100
    %v610 = vunpack.c.l.b16 %v101
    %v611 = vunpack.c.l.b16 %v102
    %v612 = vunpack.c.l.b16 %v103
    %v613 = vunpack.c.l.b16 %v104
    %v614 = vunpack.c.l.b16 %v105
    %v615 = vunpack.c.l.b16 %v106
    %v616 = vunpack.c.l.b16 %v107
    %v617 = vunpack.c.l.b16 %v108
    %v618 = vunpack.c.l.b16 %v109
    %v619 = vunpack.c.l.b16 %v110
    %v620 = vunpack.c.l.b16 %v111
    %v621 = vunpack.c.l.b16 %v112
    %v622 = vunpack.c.l.b16 %v113
    %v623 = vunpack.c.l.b16 %v114
    %v624 = vunpack.c.l.b16 %v115
    %v625 = vunpack.c.l.b16 %v116
    %v626 = vunpack.c.l.b16 %v117
    %v627 = vunpack.c.l.b16 %v118
    %v628 = vunpack.c.l.b16 %v119
    %v629 = vunpack.c.l.b16 %v120
    %v630 = vunpack.c.l.b16 %v121
    %v631 = vunpack.c.l.b16 %v122
    %v632 = vunpack.c.l.b16 %v123
    %v633 = vunpack.c.l.b16 %v124
    %v634 = vunpack.c.l.b16 %v125
    %v635 = vunpack.c.l.b16 %v126
    %v636 = vunpack.c.l.b16 %v127
    %v637 = vunpack.c.l.b16 %v128
    %v638 = vunpack.c.l.b16 %v129
    %v639 = vunpack.c.l.b16 %v130
    %v640 = vunpack.c.l.b16 %v131
    %v641 = vunpack.c.l.b16 %v132
    %v642 = vunpack.c.l.b16 %v133
    %v643 = vunpack.c.l.b16 %v134
    %v644 = vunpack.c.l.b16 %v135
    %v645 = vunpack.c.l.b16 %v136
    %v646 = vunpack.c.l.b16 %v137
    %v647 = vunpack.c.l.b16 %v138
    %v648 = vunpack.c.l.b16 %v139
    %v649 = vunpack.c.l.b16 %v140
    %v650 = vunpack.c.l.b16 %v141
    %v651 = vunpack.c.l.b16 %v142
    %v652 = vunpack.c.l.b16 %v143
    %v653 = vunpack.c.l.b16 %v144
    %v654 = vunpack.c.l.b16 %v145
    %v655 = vunpack.c.l.b16 %v146
    %v656 = vunpack.c.l.b16 %v147
    %v657 = vunpack.c.l.b16 %v148
    %v658 = vunpack.c.l.b16 %v149
    %v659 = vunpack.c.l.b16 %v150
    %v660 = vunpack.c.l.b16 %v151
    %v661 = vunpack.c.l.b16 %v152
    %v662 = vunpack.c.l.b16 %v153
    %v663 = vunpack.c.l.b16 %v154
    %v664 = vunpack.c.l.b16 %v155
    %v665 = vunpack.c.l.b16 %v156
    %v666 = vunpack.c.l.b16 %v157
    %v667 = vunpack.c.l.b16 %v158
    %v668 = vunpack.c.l.b16 %v159
    %v669 = vunpack.c.l.b16 %v160
    %v670 = vunpack.c.l.b16 %v161
    %v671 = vunpack.c.l.b16 %v162
    %v672 = vunpack.c.l.b16 %v163
    %v673 = vunpack.c.l.b16 %v164
    %v674 = vunpack.c.l.b16 %v165
    %v675 = vunpack.c.l.b16 %v166
    %v676 = vunpack.c.l.b16 %v167
    %v677 = vunpack.c.l.b16 %v168
    %v678 = vunpack.c.l.b16 %v169
    %v679 = vunpack.c.l.b16 %v170
    %v680 = vunpack.c.l.b16 %v171
    %v681 = vunpack.c.l.b16 %v172
    %v682 = vunpack.c.l.b16 %v173
    %v683 = vunpack.c.l.b16 %v174
    %v684 = vunpack.c.l.b16 %v175
    %v685 = vunpack.c.l.b16 %v176
    %v686 = vunpack.c.l.b16 %v177
    %v687 = vunpack.c.l.b16 %v178
    %v688 = vunpack.c.l.b16 %v179
    %v689 = vunpack.c.l.b16 %v180
    %v690 = vunpack.c.l.b16 %v181
    %v691 = vunpack.c.l.b16 %v182
    %v692 = vunpack.c.l.b16 %v183
    %v693 = vunpack.c.l.b16 %v184
    %v694 = vunpack.c.l.b16 %v185
    %v695 = vunpack.c.l.b16 %v186
    %v696 = vunpack.c.l.b16 %v187
    %v697 = vunpack.c.l.b16 %v188
    %v698 = vunpack.c.l.b16 %v189
    %v699 = vunpack.c.l.b16 %v190
    %v700 = vunpack.c.l.b16 %v191
    %v701 = vunpack.c.l.b16 %v192
    %v702 = vunpack.c.l.b16 %v193
    %v703 = vunpack.c.l.b16 %v194
    %v704 = vunpack.c.l.b16 %v195
    %v705 = vunpack.c.l.b16 %v196
    %v706 = vunpack.c.l.b16 %v197
    %v707 = vunpack.c.l.b16 %v198
    %v708 = vunpack.c.l.b16 %v199
    %v709 = vunpack.c.l.b16 %v200
    %v710 = vunpack.c.l.b16 %v201
    %v711 = vunpack.c.l.b16 %v202
    %v712 = vunpack.c.l.b16 %v203
    %v713 = vunpack.c.l.b16 %v204
    %v714 = vunpack.c.l.b16 %v205
    %v715 = vunpack.c.l.b16 %v206
    %v716 = vunpack.c.l.b16 %v207
    %v717 = vunpack.c.l.b16 %v208
    %v718 = vunpack.c.l.b16 %v209
    %v719 = vunpack.c.l.b16 %v210
    %v720 = vunpack.c.l.b16 %v211
    %v721 = vunpack.c.l.b16 %v212
    %v722 = vunpack.c.l.b16 %v213
    %v723 = vunpack.c.l.b16 %v214
    %v724 = vunpack.c.l.b16 %v215
    %v725 = vunpack.c.l.b16 %v216
    %v726 = vunpack.c.l.b16 %v217
    %v727 = vunpack.c.l.b16 %v218
    %v728 = vunpack.c.l.b16 %v219
    %v729 = vunpack.c.l.b16 %v220
    %v730 = vunpack.c.l.b16 %v221
    %v731 = vunpack.c.l.b16 %v222
    %v732 = vunpack.c.l.b16 %v223
    %v733 = vpack.c.b16 %v534, %v533
    %v734 = vpack.c.b16 %v536, %v535
    %v735 = vpack.c.b16 %v538, %v537
    %v736 = vpack.c.b16 %v540, %v539
    %v737 = vpack.c.b16 %v542, %v541
    %v738 = vpack.c.b16 %v544, %v543
    %v739 = vpack.c.b16 %v546, %v545
    %v740 = vpack.c.b16 %v548, %v547
    %v741 = vpack.c.b16 %v550, %v549
    %v742 = vpack.c.b16 %v552, %v551
    %v743 = vpack.c.b16 %v554, %v553
    %v744 = vpack.c.b16 %v556, %v555
    %v745 = vpack.c.b16 %v558, %v557
    %v746 = vpack.c.b16 %v560, %v559
    %v747 = vpack.c.b16 %v562, %v561
    %v748 = vpack.c.b16 %v564, %v563
    %v749 = vpack.c.b16 %v566, %v565
    %v750 = vpack.c.b16 %v568, %v567
    %v751 = vpack.c.b16 %v570, %v569
    %v752 = vpack.c.b16 %v572, %v571
    %v753 = vpack.c.b16 %v574, %v573
    %v754 = vpack.c.b16 %v576, %v575
    %v755 = vpack.c.b16 %v578, %v577
    %v756 = vpack.c.b16 %v580, %v579
    %v757 = vpack.c.b16 %v582, %v581
    %v758 = vpack.c.b16 %v584, %v583
    %v759 = vpack.c.b16 %v586, %v585
    %v760 = vpack.c.b16 %v588, %v587
    %v761 = vpack.c.b16 %v590, %v589
    %v762 = vpack.c.b16 %v592, %v591
    %v763 = vpack.c.b16 %v594, %v593
    %v764 = vpack.c.b16 %v596, %v595
    %v765 = vpack.c.b16 %v598, %v597
    %v766 = vpack.c.b16 %v600, %v599
    %v767 = vpack.c.b16 %v602, %v601
    %v768 = vpack.c.b16 %v604, %v603
    %v769 = vpack.c.b16 %v606, %v605
    %v770 = vpack.c.b16 %v608, %v607
    %v771 = vpack.c.b16 %v610, %v609
    %v772 = vpack.c.b16 %v612, %v611
    %v773 = vpack.c.b16 %v614, %v613
    %v774 = vpack.c.b16 %v616, %v615
    %v775 = vpack.c.b16 %v618, %v617
    %v776 = vpack.c.b16 %v620, %v619
    %v777 = vpack.c.b16 %v622, %v621
    %v778 = vpack.c.b16 %v624, %v623
    %v779 = vpack.c.b16 %v626, %v625
    %v780 = vpack.c.b16 %v628, %v627
    %v781 = vpack.c.b16 %v630, %v629
    %v782 = vpack.c.b16 %v632, %v631
    %v783 = vpack.c.b16 %v634, %v633
    %v784 = vpack.c.b16 %v636, %v635
    %v785 = vpack.c.b16 %v638, %v637
    %v786 = vpack.c.b16 %v640, %v639
    %v787 = vpack.c.b16 %v642, %v641
    %v788 = vpack.c.b16 %v644, %v643
    %v789 = vpack.c.b16 %v646, %v645
    %v790 = vpack.c.b16 %v648, %v647
    %v791 = vpack.c.b16 %v650, %v649
    %v792 = vpack.c.b16 %v652, %v651
    %v793 = vpack.c.b16 %v654, %v653
    %v794 = vpack.c.b16 %v656, %v655
    %v795 = vpack.c.b16 %v658, %v657
    %v796 = vpack.c.b16 %v660, %v659
    %v797 = vpack.c.b16 %v662, %v661
    %v798 = vpack.c.b16 %v664, %v663
    %v799 = vpack.c.b16 %v666, %v665
    %v800 = vpack.c.b16 %v668, %v667
    %v801 = vpack.c.b16 %v670, %v669
    %v802 = vpack.c.b16 %v672, %v671
    %v803 = vpack.c.b16 %v674, %v673
    %v804 = vpack.c.b16 %v676, %v675
    %v805 = vpack.c.b16 %v678, %v677
    %v806 = vpack.c.b16 %v680, %v679
    %v807 = vpack.c.b16 %v682, %v681
    %v808 = vpack.c.b16 %v684, %v683
    %v809 = vpack.c.b16 %v686, %v685
    %v810 = vpack.c.b16 %v688, %v687
    %v811 = vpack.c.b16 %v690, %v689
    %v812 = vpack.c.b16 %v692, %v691
    %v813 = vpack.c.b16 %v694, %v693
    %v814 = vpack.c.b16 %v696, %v695
    %v815 = vpack.c.b16 %v698, %v697
    %v816 = vpack.c.b16 %v700, %v699
    %v817 = vpack.c.b16 %v702, %v701
    %v818 = vpack.c.b16 %v704, %v703
    %v819 = vpack.c.b16 %v706, %v705
    %v820 = vpack.c.b16 %v708, %v707
    %v821 = vpack.c.b16 %v710, %v709
    %v822 = vpack.c.b16 %v712, %v711
    %v823 = vpack.c.b16 %v714, %v713
    %v824 = vpack.c.b16 %v716, %v715
    %v825 = vpack.c.b16 %v718, %v717
    %v826 = vpack.c.b16 %v720, %v719
    %v827 = vpack.c.b16 %v722, %v721
    %v828 = vpack.c.b16 %v724, %v723
    %v829 = vpack.c.b16 %v726, %v725
    %v830 = vpack.c.b16 %v728, %v727
    %v831 = vpack.c.b16 %v730, %v729
    %v832 = vpack.c.b16 %v732, %v731
    %vm933 = vcmask 523264
    %v935 = vsel %vm933, %v311, 0
    %937 = vmatprep.subr.bf16.mxu0 0
    %938 = vmatpush1.bf16.msra.mxu0 %v733
    %939 = vmatprep.subr.bf16.mxu0 0
    %940 = vmatpush1.bf16.msra.mxu0 %v734
    %941 = vmatprep.subr.bf16.mxu0 0
    %942 = vmatpush1.bf16.msra.mxu0 %v735
    %943 = vmatprep.subr.bf16.mxu0 0
    %944 = vmatpush1.bf16.msra.mxu0 %v736
    %945 = vmatprep.subr.bf16.mxu0 0
    %946 = vmatpush1.bf16.msra.mxu0 %v737
    %947 = vmatprep.subr.bf16.mxu0 0
    %948 = vmatpush1.bf16.msra.mxu0 %v738
    %949 = vmatprep.subr.bf16.mxu0 0
    %950 = vmatpush1.bf16.msra.mxu0 %v739
    %951 = vmatprep.subr.bf16.mxu0 0
    %952 = vmatpush1.bf16.msra.mxu0 %v740
    %953 = vmatprep.subr.bf16.mxu0 0
    %954 = vmatpush1.bf16.msra.mxu0 %v741
    %955 = vmatprep.subr.bf16.mxu0 0
    %956 = vmatpush1.bf16.msra.mxu0 %v742
    %957 = vmatprep.subr.bf16.mxu0 0
    %958 = vmatpush1.bf16.msra.mxu0 %v743
    %959 = vmatprep.subr.bf16.mxu0 0
    %960 = vmatpush1.bf16.msra.mxu0 %v744
    %961 = vmatprep.subr.bf16.mxu0 0
    %962 = vmatpush1.bf16.msra.mxu0 %v745
    %963 = vmatprep.subr.bf16.mxu0 0
    %964 = vmatpush1.bf16.msra.mxu0 %v746
    %965 = vmatprep.subr.bf16.mxu0 0
    %966 = vmatpush1.bf16.msra.mxu0 %v747
    %967 = vmatprep.subr.bf16.mxu0 0
    %968 = vmatpush1.bf16.msra.mxu0 %v748
    %969 = vmatprep.mubr.bf16.mxu0 %v270
    %970 = vmatmul.mubr.bf16.gmra.mrb[0].mxu0 %v256
    %v971 = vpop.f32.mrb[0].mxu0
    %v972 = vadd.f32 %v229, %v971
    %v973 = vpop.f32.mrb[0].mxu0
    %v974 = vpop.f32.mrb[0].mxu0
    %v975 = vpop.f32.mrb[0].mxu0
    %976 = vdwg.mxu0
    %977 = vmatprep.subr.bf16.mxu0 0
    %978 = vmatpush1.bf16.msra.mxu0 %v749
    %979 = vmatprep.subr.bf16.mxu0 0
    %980 = vmatpush1.bf16.msra.mxu0 %v750
    %981 = vmatprep.subr.bf16.mxu0 0
    %982 = vmatpush1.bf16.msra.mxu0 %v751
    %983 = vmatprep.subr.bf16.mxu0 0
    %984 = vmatpush1.bf16.msra.mxu0 %v752
    %985 = vmatprep.subr.bf16.mxu0 0
    %986 = vmatpush1.bf16.msra.mxu0 %v753
    %987 = vmatprep.subr.bf16.mxu0 0
    %988 = vmatpush1.bf16.msra.mxu0 %v754
    %989 = vmatprep.subr.bf16.mxu0 0
    %990 = vmatpush1.bf16.msra.mxu0 %v755
    %991 = vmatprep.subr.bf16.mxu0 0
    %992 = vmatpush1.bf16.msra.mxu0 %v756
    %993 = vmatprep.subr.bf16.mxu0 0
    %994 = vmatpush1.bf16.msra.mxu0 %v757
    %995 = vmatprep.subr.bf16.mxu0 0
    %996 = vmatpush1.bf16.msra.mxu0 %v758
    %997 = vmatprep.subr.bf16.mxu0 0
    %998 = vmatpush1.bf16.msra.mxu0 %v759
    %999 = vmatprep.subr.bf16.mxu0 0
    %1000 = vmatpush1.bf16.msra.mxu0 %v760
    %1001 = vmatprep.subr.bf16.mxu0 0
    %1002 = vmatpush1.bf16.msra.mxu0 %v761
    %1003 = vmatprep.subr.bf16.mxu0 0
    %1004 = vmatpush1.bf16.msra.mxu0 %v762
    %1005 = vmatprep.subr.bf16.mxu0 0
    %1006 = vmatpush1.bf16.msra.mxu0 %v763
    %1007 = vmatprep.subr.bf16.mxu0 0
    %1008 = vmatpush1.bf16.msra.mxu0 %v764
    %1009 = vmatprep.mubr.bf16.mxu0 %v280
    %1010 = vmatmul.mubr.bf16.gmra.mrb[0].mxu0 %v278
    %v1011 = vpop.f32.mrb[0].mxu0
    %v1012 = vadd.f32 %v972, %v1011
    %v1013 = vpop.f32.mrb[0].mxu0
    %v1014 = vpop.f32.mrb[0].mxu0
    %v1015 = vpop.f32.mrb[0].mxu0
    %1016 = vdwg.mxu0
    %1017 = vmatprep.subr.bf16.mxu0 0
    %1018 = vmatpush1.bf16.msra.mxu0 %v765
    %1019 = vmatprep.subr.bf16.mxu0 0
    %1020 = vmatpush1.bf16.msra.mxu0 %v766
    %1021 = vmatprep.subr.bf16.mxu0 0
    %1022 = vmatpush1.bf16.msra.mxu0 %v767
    %1023 = vmatprep.subr.bf16.mxu0 0
    %1024 = vmatpush1.bf16.msra.mxu0 %v768
    %1025 = vmatprep.subr.bf16.mxu0 0
    %1026 = vmatpush1.bf16.msra.mxu0 %v769
    %1027 = vmatprep.subr.bf16.mxu0 0
    %1028 = vmatpush1.bf16.msra.mxu0 %v770
    %1029 = vmatprep.subr.bf16.mxu0 0
    %1030 = vmatpush1.bf16.msra.mxu0 %v771
    %1031 = vmatprep.subr.bf16.mxu0 0
    %1032 = vmatpush1.bf16.msra.mxu0 %v772
    %1033 = vmatprep.subr.bf16.mxu0 0
    %1034 = vmatpush1.bf16.msra.mxu0 %v773
    %1035 = vmatprep.subr.bf16.mxu0 0
    %1036 = vmatpush1.bf16.msra.mxu0 %v774
    %1037 = vmatprep.subr.bf16.mxu0 0
    %1038 = vmatpush1.bf16.msra.mxu0 %v775
    %1039 = vmatprep.subr.bf16.mxu0 0
    %1040 = vmatpush1.bf16.msra.mxu0 %v776
    %1041 = vmatprep.subr.bf16.mxu0 0
    %1042 = vmatpush1.bf16.msra.mxu0 %v777
    %1043 = vmatprep.subr.bf16.mxu0 0
    %1044 = vmatpush1.bf16.msra.mxu0 %v778
    %1045 = vmatprep.subr.bf16.mxu0 0
    %1046 = vmatpush1.bf16.msra.mxu0 %v779
    %1047 = vmatprep.subr.bf16.mxu0 0
    %1048 = vmatpush1.bf16.msra.mxu0 %v780
    %1049 = vmatprep.mubr.bf16.mxu0 %v277
    %1050 = vmatmul.mubr.bf16.gmra.mrb[0].mxu0 %v263
    %v1051 = vpop.f32.mrb[0].mxu0
    %v1052 = vadd.f32 %v1012, %v1051
    %v1053 = vpop.f32.mrb[0].mxu0
    %v1054 = vpop.f32.mrb[0].mxu0
    %v1055 = vpop.f32.mrb[0].mxu0
    %1056 = vdwg.mxu0
    %1057 = vmatprep.subr.bf16.mxu0 0
    %1058 = vmatpush1.bf16.msra.mxu0 %v781
    %1059 = vmatprep.subr.bf16.mxu0 0
    %1060 = vmatpush1.bf16.msra.mxu0 %v782
    %1061 = vmatprep.subr.bf16.mxu0 0
    %1062 = vmatpush1.bf16.msra.mxu0 %v783
    %1063 = vmatprep.subr.bf16.mxu0 0
    %1064 = vmatpush1.bf16.msra.mxu0 %v784
    %1065 = vmatprep.subr.bf16.mxu0 0
    %1066 = vmatpush1.bf16.msra.mxu0 %v785
    %1067 = vmatprep.subr.bf16.mxu0 0
    %1068 = vmatpush1.bf16.msra.mxu0 %v786
    %1069 = vmatprep.subr.bf16.mxu0 0
    %1070 = vmatpush1.bf16.msra.mxu0 %v787
    %1071 = vmatprep.subr.bf16.mxu0 0
    %1072 = vmatpush1.bf16.msra.mxu0 %v788
    %1073 = vmatprep.subr.bf16.mxu0 0
    %1074 = vmatpush1.bf16.msra.mxu0 %v789
    %1075 = vmatprep.subr.bf16.mxu0 0
    %1076 = vmatpush1.bf16.msra.mxu0 %v790
    %1077 = vmatprep.subr.bf16.mxu0 0
    %1078 = vmatpush1.bf16.msra.mxu0 %v791
    %1079 = vmatprep.subr.bf16.mxu0 0
    %1080 = vmatpush1.bf16.msra.mxu0 %v792
    %1081 = vmatprep.subr.bf16.mxu0 0
    %1082 = vmatpush1.bf16.msra.mxu0 %v793
    %1083 = vmatprep.subr.bf16.mxu0 0
    %1084 = vmatpush1.bf16.msra.mxu0 %v794
    %1085 = vmatprep.subr.bf16.mxu0 0
    %1086 = vmatpush1.bf16.msra.mxu0 %v795
    %1087 = vmatprep.subr.bf16.mxu0 0
    %1088 = vmatpush1.bf16.msra.mxu0 %v796
    %1089 = vmatprep.mubr.bf16.mxu0 %v281
    %1090 = vmatmul.mubr.bf16.gmra.mrb[0].mxu0 %v279
    %v1091 = vpop.f32.mrb[0].mxu0
    %v1092 = vadd.f32 %v1052, %v1091
    %v1093 = vpop.f32.mrb[0].mxu0
    %v1094 = vpop.f32.mrb[0].mxu0
    %v1095 = vpop.f32.mrb[0].mxu0
    %1096 = vdwg.mxu0
    %1097 = vmatprep.subr.bf16.mxu0 0
    %1098 = vmatpush1.bf16.msra.mxu0 %v797
    %1099 = vmatprep.subr.bf16.mxu0 0
    %1100 = vmatpush1.bf16.msra.mxu0 %v798
    %1101 = vmatprep.subr.bf16.mxu0 0
    %1102 = vmatpush1.bf16.msra.mxu0 %v799
    %1103 = vmatprep.subr.bf16.mxu0 0
    %1104 = vmatpush1.bf16.msra.mxu0 %v800
    %1105 = vmatprep.subr.bf16.mxu0 0
    %1106 = vmatpush1.bf16.msra.mxu0 %v801
    %1107 = vmatprep.subr.bf16.mxu0 0
    %1108 = vmatpush1.bf16.msra.mxu0 %v802
    %1109 = vmatprep.subr.bf16.mxu0 0
    %1110 = vmatpush1.bf16.msra.mxu0 %v803
    %1111 = vmatprep.subr.bf16.mxu0 0
    %1112 = vmatpush1.bf16.msra.mxu0 %v804
    %1113 = vmatprep.subr.bf16.mxu0 0
    %1114 = vmatpush1.bf16.msra.mxu0 %v805
    %1115 = vmatprep.subr.bf16.mxu0 0
    %1116 = vmatpush1.bf16.msra.mxu0 %v806
    %1117 = vmatprep.subr.bf16.mxu0 0
    %1118 = vmatpush1.bf16.msra.mxu0 %v807
    %1119 = vmatprep.subr.bf16.mxu0 0
    %1120 = vmatpush1.bf16.msra.mxu0 %v808
    %1121 = vmatprep.subr.bf16.mxu0 0
    %1122 = vmatpush1.bf16.msra.mxu0 %v809
    %1123 = vmatprep.subr.bf16.mxu0 0
    %1124 = vmatpush1.bf16.msra.mxu0 %v810
    %1125 = vmatprep.subr.bf16.mxu0 0
    %1126 = vmatpush1.bf16.msra.mxu0 %v811
    %1127 = vmatprep.subr.bf16.mxu0 0
    %1128 = vmatpush1.bf16.msra.mxu0 %v812
    %1129 = vmatprep.mubr.bf16.mxu0 %v318
    %1130 = vmatmul.mubr.bf16.gmra.mrb[0].mxu0 %v304
    %v1131 = vpop.f32.mrb[0].mxu0
    %v1132 = vadd.f32 %v1092, %v1131
    %v1133 = vpop.f32.mrb[0].mxu0
    %v1134 = vpop.f32.mrb[0].mxu0
    %v1135 = vpop.f32.mrb[0].mxu0
    %1136 = vdwg.mxu0
    %1137 = vmatprep.subr.bf16.mxu0 0
    %1138 = vmatpush1.bf16.msra.mxu0 %v813
    %1139 = vmatprep.subr.bf16.mxu0 0
    %1140 = vmatpush1.bf16.msra.mxu0 %v814
    %1141 = vmatprep.subr.bf16.mxu0 0
    %1142 = vmatpush1.bf16.msra.mxu0 %v815
    %1143 = vmatprep.subr.bf16.mxu0 0
    %1144 = vmatpush1.bf16.msra.mxu0 %v816
    %1145 = vmatprep.subr.bf16.mxu0 0
    %1146 = vmatpush1.bf16.msra.mxu0 %v817
    %1147 = vmatprep.subr.bf16.mxu0 0
    %1148 = vmatpush1.bf16.msra.mxu0 %v818
    %1149 = vmatprep.subr.bf16.mxu0 0
    %1150 = vmatpush1.bf16.msra.mxu0 %v819
    %1151 = vmatprep.subr.bf16.mxu0 0
    %1152 = vmatpush1.bf16.msra.mxu0 %v820
    %1153 = vmatprep.subr.bf16.mxu0 0
    %1154 = vmatpush1.bf16.msra.mxu0 %v821
    %1155 = vmatprep.subr.bf16.mxu0 0
    %1156 = vmatpush1.bf16.msra.mxu0 %v822
    %1157 = vmatprep.subr.bf16.mxu0 0
    %1158 = vmatpush1.bf16.msra.mxu0 %v823
    %1159 = vmatprep.subr.bf16.mxu0 0
    %1160 = vmatpush1.bf16.msra.mxu0 %v824
    %1161 = vmatprep.subr.bf16.mxu0 0
    %1162 = vmatpush1.bf16.msra.mxu0 %v825
    %1163 = vmatprep.subr.bf16.mxu0 0
    %1164 = vmatpush1.bf16.msra.mxu0 %v826
    %1165 = vmatprep.subr.bf16.mxu0 0
    %1166 = vmatpush1.bf16.msra.mxu0 %v827
    %1167 = vmatprep.subr.bf16.mxu0 0
    %1168 = vmatpush1.bf16.msra.mxu0 %v828
    %1169 = vmatprep.mubr.bf16.mxu0 %v320
    %1170 = vmatmul.mubr.bf16.gmra.mrb[0].mxu0 %v319
    %v1171 = vpop.f32.mrb[0].mxu0
    %v1172 = vadd.f32 %v1132, %v1171
    %v1173 = vpop.f32.mrb[0].mxu0
    %v1174 = vpop.f32.mrb[0].mxu0
    %v1175 = vpop.f32.mrb[0].mxu0
    %1176 = vdwg.mxu0
    %1177 = vmatprep.subr.bf16.mxu0 0
    %1178 = vmatpush1.bf16.msra.mxu0 %v829
    %1179 = vmatprep.subr.bf16.mxu0 0
    %1180 = vmatpush1.bf16.msra.mxu0 %v830
    %1181 = vmatprep.subr.bf16.mxu0 0
    %1182 = vmatpush1.bf16.msra.mxu0 %v831
    %1183 = vmatprep.subr.bf16.mxu0 0
    %1184 = vmatpush1.bf16.msra.mxu0 %v832
    %1185 = vmatprep.subr.bf16.mxu0 0
    %1186 = vmatpush1.bf16.msra.mxu0 0
    %1187 = vmatprep.subr.bf16.mxu0 0
    %1188 = vmatpush1.bf16.msra.mxu0 0
    %1189 = vmatprep.subr.bf16.mxu0 0
    %1190 = vmatpush1.bf16.msra.mxu0 0
    %1191 = vmatprep.subr.bf16.mxu0 0
    %1192 = vmatpush1.bf16.msra.mxu0 0
    %1193 = vmatprep.subr.bf16.mxu0 0
    %1194 = vmatpush1.bf16.msra.mxu0 0
    %1195 = vmatprep.subr.bf16.mxu0 0
    %1196 = vmatpush1.bf16.msra.mxu0 0
    %1197 = vmatprep.subr.bf16.mxu0 0
    %1198 = vmatpush1.bf16.msra.mxu0 0
    %1199 = vmatprep.subr.bf16.mxu0 0
    %1200 = vmatpush1.bf16.msra.mxu0 0
    %1201 = vmatprep.subr.bf16.mxu0 0
    %1202 = vmatpush1.bf16.msra.mxu0 0
    %1203 = vmatprep.subr.bf16.mxu0 0
    %1204 = vmatpush1.bf16.msra.mxu0 0
    %1205 = vmatprep.subr.bf16.mxu0 0
    %1206 = vmatpush1.bf16.msra.mxu0 0
    %1207 = vmatprep.subr.bf16.mxu0 0
    %1208 = vmatpush1.bf16.msra.mxu0 0
    %1209 = vmatprep.mubr.bf16.mxu0 0
    %1210 = vmatmul.mubr.bf16.gmra.mrb[0].mxu0 %v935
    %v1211 = vpop.f32.mrb[0].mxu0
    %v1212 = vadd.f32 %v1172, %v1211
    %v1213 = vpop.f32.mrb[0].mxu0
    %v1214 = vpop.f32.mrb[0].mxu0
    %v1215 = vpop.f32.mrb[0].mxu0
    %1216 = vdwg.mxu0
    %v1217 = vmax.f32 %v1212, 0.0
    %v1218 = vpack.c.bf16 %v1217, %v1217
    %v1219 = vld [vmem:[%s3] sm:$0xf]
    %v1220 = vld [vmem:[%s3 + $0x4] sm:$0xf]
    %v1221 = vld [vmem:[%s3 + $0x8] sm:$0xf]
    %v1222 = vld [vmem:[%s3 + $0xc] sm:$0xf]
    %v1223 = vld [vmem:[%s3 + $0x10] sm:$0xf]
    %v1224 = vld [vmem:[%s3 + $0x14] sm:$0xf]
    %v1225 = vld [vmem:[%s3 + $0x18] sm:$0xf]
    %v1226 = vld [vmem:[%s3 + $0x1c] sm:$0xf]
    %v1227 = vld [vmem:[%s3 + $0x20] sm:$0xf]
    %v1228 = vld [vmem:[%s3 + $0x24] sm:$0xf]
    %v1229 = vld [vmem:[%s3 + $0x28] sm:$0xf]
    %v1230 = vld [vmem:[%s3 + $0x2c] sm:$0xf]
    %v1231 = vld [vmem:[%s3 + $0x30] sm:$0xf]
    %v1232 = vld [vmem:[%s3 + $0x34] sm:$0xf]
    %v1233 = vld [vmem:[%s3 + $0x38] sm:$0xf]
    %v1234 = vld [vmem:[%s3 + $0x3c] sm:$0xf]
    %v1235 = vld [vmem:[%s4] sm:$0x1]
    %v1237 = vlaneseq
    %v1238 = vshrl.u32 %v1237, 7
    %v1239 = vsub.s32 0, %v1238
    %v1240 = vrot.slane %v1235, %v1239
    %v1258 = vunpack.c.l.b16 %v1219
    %v1259 = vunpack.c.l.b16 %v1220
    %v1260 = vunpack.c.l.b16 %v1221
    %v1261 = vunpack.c.l.b16 %v1222
    %v1262 = vunpack.c.l.b16 %v1223
    %v1263 = vunpack.c.l.b16 %v1224
    %v1264 = vunpack.c.l.b16 %v1225
    %v1265 = vunpack.c.l.b16 %v1226
    %v1266 = vunpack.c.l.b16 %v1227
    %v1267 = vunpack.c.l.b16 %v1228
    %v1268 = vunpack.c.l.b16 %v1229
    %v1269 = vunpack.c.l.b16 %v1230
    %v1270 = vunpack.c.l.b16 %v1231
    %v1271 = vunpack.c.l.b16 %v1232
    %v1272 = vunpack.c.l.b16 %v1233
    %v1273 = vunpack.c.l.b16 %v1234
    %v1274 = vpack.c.b16 %v1259, %v1258
    %v1275 = vpack.c.b16 %v1261, %v1260
    %v1276 = vpack.c.b16 %v1263, %v1262
    %v1277 = vpack.c.b16 %v1265, %v1264
    %v1278 = vpack.c.b16 %v1267, %v1266
    %v1279 = vpack.c.b16 %v1269, %v1268
    %v1280 = vpack.c.b16 %v1271, %v1270
    %v1281 = vpack.c.b16 %v1273, %v1272
    %1290 = vmatprep.subr.bf16.mxu0 0
    %1291 = vmatpush1.bf16.msra.mxu0 %v1274
    %1292 = vmatprep.subr.bf16.mxu0 0
    %1293 = vmatpush1.bf16.msra.mxu0 %v1275
    %1294 = vmatprep.subr.bf16.mxu0 0
    %1295 = vmatpush1.bf16.msra.mxu0 %v1276
    %1296 = vmatprep.subr.bf16.mxu0 0
    %1297 = vmatpush1.bf16.msra.mxu0 %v1277
    %1298 = vmatprep.subr.bf16.mxu0 0
    %1299 = vmatpush1.bf16.msra.mxu0 %v1278
    %1300 = vmatprep.subr.bf16.mxu0 0
    %1301 = vmatpush1.bf16.msra.mxu0 %v1279
    %1302 = vmatprep.subr.bf16.mxu0 0
    %1303 = vmatpush1.bf16.msra.mxu0 %v1280
    %1304 = vmatprep.subr.bf16.mxu0 0
    %1305 = vmatpush1.bf16.msra.mxu0 %v1281
    %1306 = vmatprep.subr.bf16.mxu0 0
    %1307 = vmatpush1.bf16.msra.mxu0 0
    %1308 = vmatprep.subr.bf16.mxu0 0
    %1309 = vmatpush1.bf16.msra.mxu0 0
    %1310 = vmatprep.subr.bf16.mxu0 0
    %1311 = vmatpush1.bf16.msra.mxu0 0
    %1312 = vmatprep.subr.bf16.mxu0 0
    %1313 = vmatpush1.bf16.msra.mxu0 0
    %1314 = vmatprep.subr.bf16.mxu0 0
    %1315 = vmatpush1.bf16.msra.mxu0 0
    %1316 = vmatprep.subr.bf16.mxu0 0
    %1317 = vmatpush1.bf16.msra.mxu0 0
    %1318 = vmatprep.subr.bf16.mxu0 0
    %1319 = vmatpush1.bf16.msra.mxu0 0
    %1320 = vmatprep.subr.bf16.mxu0 0
    %1321 = vmatpush1.bf16.msra.mxu0 0
    %1322 = vmatprep.mubr.bf16.mxu0 0
    %1323 = vmatmul.mubr.bf16.gmra.mrb[0].mxu0 %v1218
    %v1324 = vpop.f32.mrb[0].mxu0
    %v1325 = vadd.f32 %v1240, %v1324
    %v1326 = vpop.f32.mrb[0].mxu0
    %v1327 = vpop.f32.mrb[0].mxu0
    %v1328 = vpop.f32.mrb[0].mxu0
    %1329 = vdwg.mxu0
    %vm1330 = vcmask 1041408
    %v1331 = vsel %vm1330, %v1325, -inf
    %1332 = vmax.xlane.f32.xlu0 %v1331
    %v1333 = vpop.xlane.xlu0 %1332
    %v1334 = vsub.f32 %v1325, %v1333
    %v1335 = vmul.f32 %v1334, 1.442695
    %v1336 = vpow.pop %v1335
    %v1337 = vsel %vm1330, %v1336, 0.0
    %1338 = vadd.xlane.f32.xlu0 %v1337
    %v1339 = vpop.xlane.xlu0 %1338
    %v1340 = vlog2.pop %v1339
    %v1341 = vmul.f32 %v1340, 0.6931472
    %v1342 = vadd.f32 %v1333, %v1341
    %v1343 = vsub.f32 %v1325, %v1342
    %1344 = vst [vmem:[#allocation2] sm:$0x3] %v1343
    // Predicated region
    $region22: #{forward.5} parent=1 // pred_check
      _
    $region23: #{forward.5} parent=1 // pred_check_branch
      %1346 = sbr.rel (0) target = $region25
    $region24: #{forward.5} parent=1 // pred_region
      %s1348 = ssub.s32 32, 32
      %1349 = vsyncadd [#allocation3], %s1348
      %s1351 = sshll.u32 [#allocation2], 4
      %s1352 = int_to_ptr.vmem [resolvable:$true] %s1351
      %1354 = dma.vmem_to_hbm [thread:$0]  %s1352, 32, %s5, [#allocation3]
    $region25: #{forward.5} parent=1 // pred_fallthru
      _
    // Predicated region
    $region26: #{forward.5} parent=1 // pred_check
      _
    $region27: #{forward.5} parent=1 // pred_check_branch
      %1356 = sbr.rel (0) target = $region29
    $region28: #{forward.5} parent=1 // pred_region
      %1357 = dma.done [#allocation3], 32
    $region29: #{forward.5} parent=1 // pred_fallthru
      _
    %1358 = vsyncpa [#allocation3], 1

</llo_original>
